<compile_context>
chip_gen: v7x
topology: tpu7x:2x2x1
jax: 0.10.0
libtpu: 0.0.40
codegen_flags: <defaults>
</compile_context>

<pallas_src>
import functools

import jax
import jax.numpy as jnp
from jax.experimental import pallas as pl
from jax.experimental.pallas import tpu as pltpu


# ----------------------------------------------------------------------------
# helpers
# ----------------------------------------------------------------------------

def _round_up(x, m):
    return (x + m - 1) // m * m


def _pick_tile(dim, cap, step):
    """Largest multiple of `step` that divides `dim` and is <= cap.
    `dim` must already be a multiple of `step`."""
    best = step
    d = step
    limit = min(dim, cap)
    while d <= limit:
        if dim % d == 0:
            best = d
        d += step
    return best


def _plan_m(M, cap=512):
    """(Mp, tm): pad M to a multiple of 16 and pick the M tile in [128, cap]
    (multiples of 16) that minimizes padding waste, instead of rounding Mp up
    to a multiple of a fixed 512-row tile."""
    Mp0 = _round_up(M, 16)
    if Mp0 <= cap:
        return Mp0, Mp0
    best_tm, best_mp = None, None
    for tm in range(cap, 127, -16):
        mp = _round_up(Mp0, tm)
        if best_mp is None or mp < best_mp:
            best_mp, best_tm = mp, tm
    return best_mp, best_tm


def _vmem_limit(est_bytes):
    """Per-call VMEM limit from the tile plan + headroom (v7x has 64 MiB)."""
    return int(min(max(est_bytes * 1.5 + (4 << 20), 24 << 20), 56 << 20))


# ----------------------------------------------------------------------------
# Pallas kernels
# ----------------------------------------------------------------------------

def _mm_fused_kernel(*refs, relu, has_residual):
    """Tiled matmul with f32 accumulator; fused bias (+residual) (+ReLU).

    grid = (M_tiles, N_tiles, K_tiles); K (reduction) is the last axis.
    """
    if has_residual:
        a_ref, b_ref, bias_ref, r_ref, o_ref, acc_ref = refs
    else:
        a_ref, b_ref, bias_ref, o_ref, acc_ref = refs

    @pl.when(pl.program_id(2) == 0)
    def _():
        acc_ref[...] = jnp.zeros_like(acc_ref)

    acc_ref[...] += jnp.dot(a_ref[...], b_ref[...],
                            preferred_element_type=jnp.float32)

    @pl.when(pl.program_id(2) == pl.num_programs(2) - 1)
    def _():
        y = acc_ref[...] + bias_ref[...]
        if has_residual:
            y = y + r_ref[...].astype(jnp.float32)
        if relu:
            y = jnp.maximum(y, 0.0)
        o_ref[...] = y.astype(o_ref.dtype)


def _conv3x3_kernel(x_ref, w_ref, b_ref, o_ref, *, tap_offs, my, relu):
    """Direct 3x3 stride-1 conv.  x_ref holds one zero-padded image flattened
    to (Hp*Wp, C); tap (di,dj) is rows [di*Wp+dj : di*Wp+dj+my].  All 9 taps
    are accumulated in f32 on the MXU; folded-BN bias + ReLU are fused."""
    xv = x_ref[0]                                     # (Hp*Wp, C)
    acc = jnp.zeros((my, o_ref.shape[2]), jnp.float32)
    for t, off in enumerate(tap_offs):
        acc = acc + jnp.dot(xv[off:off + my, :], w_ref[t],
                            preferred_element_type=jnp.float32)
    y = acc + b_ref[...]
    if relu:
        y = jnp.maximum(y, 0.0)
    o_ref[0] = y.astype(o_ref.dtype)


# ----------------------------------------------------------------------------
# Pallas wrappers
# ----------------------------------------------------------------------------

@functools.partial(jax.jit, static_argnames=("relu", "out_dtype"))
def matmul_bias_act(a, b, bias, residual=None, *, relu=True,
                    out_dtype=jnp.bfloat16):
    """act((a @ b) + bias [+ residual]) on the MXU.

    a: (M, K), b: (K, N) -- cast to bf16, f32 accumulation.
    bias: (N,) f32.  residual: optional (M, N) added before the activation.
    """
    M, K = a.shape
    N = b.shape[1]

    a = a.astype(jnp.bfloat16)
    b = b.astype(jnp.bfloat16)
    bias = bias.astype(jnp.float32).reshape(1, N)

    # Tile plan (review): minimal M padding, full-K single-step reduction
    # where possible, and >=2 N blocks for the widest matmuls (v7x megacore).
    Mp, tm = _plan_m(M)
    Kp = _round_up(K, 128)
    tk = _pick_tile(Kp, 2048, 128)
    Np = _round_up(N, 128)
    tn = _pick_tile(Np, max(256, Np // 2), 128)
    k_steps = Kp // tk
    n_buf = 3 if k_steps >= 3 else 2        # extra weight buffer only if useful

    if (Mp, Kp) != (M, K):
        a = jnp.pad(a, ((0, Mp - M), (0, Kp - K)))
    if (Kp, Np) != (K, N):
        b = jnp.pad(b, ((0, Kp - K), (0, Np - N)))
    if Np != N:
        bias = jnp.pad(bias, ((0, 0), (0, Np - N)))

    has_residual = residual is not None
    if n_buf == 3:
        b_spec = pl.BlockSpec((tk, tn), lambda m, n, k: (k, n),
                              pipeline_mode=pl.Buffered(3))
    else:
        b_spec = pl.BlockSpec((tk, tn), lambda m, n, k: (k, n))
    in_specs = [
        pl.BlockSpec((tm, tk), lambda m, n, k: (m, k)),
        b_spec,
        pl.BlockSpec((1, tn), lambda m, n, k: (0, n)),
    ]
    operands = [a, b, bias]
    if has_residual:
        r = residual.astype(jnp.bfloat16)
        if (Mp, Np) != residual.shape:
            r = jnp.pad(r, ((0, Mp - M), (0, Np - N)))
        in_specs.append(pl.BlockSpec((tm, tn), lambda m, n, k: (m, n)))
        operands.append(r)

    est = (2 * tm * tk * 2 + n_buf * tk * tn * 2 + 2 * tn * 4 * 2
           + 2 * tm * tn * jnp.dtype(out_dtype).itemsize + tm * tn * 4
           + (2 * tm * tn * 2 if has_residual else 0))

    out = pl.pallas_call(
        functools.partial(_mm_fused_kernel, relu=relu,
                          has_residual=has_residual),
        out_shape=jax.ShapeDtypeStruct((Mp, Np), out_dtype),
        grid_spec=pltpu.PrefetchScalarGridSpec(
            num_scalar_prefetch=0,
            grid=(Mp // tm, Np // tn, k_steps),
            in_specs=in_specs,
            out_specs=pl.BlockSpec((tm, tn), lambda m, n, k: (m, n)),
            scratch_shapes=[pltpu.VMEM((tm, tn), jnp.float32)],
        ),
        compiler_params=pltpu.CompilerParams(
            dimension_semantics=("parallel", "parallel", "arbitrary"),
            vmem_limit_bytes=_vmem_limit(est)),
    )(*operands)
    return out[:M, :N]


def _conv3x3_s1_direct(x, w2d, bias, relu):
    """3x3 stride-1 pad-1 conv + folded-BN bias + ReLU with in-kernel tap
    accumulation over the padded NHWC input (no HBM im2col staging)."""
    N, H, W, C = x.shape
    Cout = w2d.shape[1]
    Hp, Wp = H + 2, W + 2
    My = H * Wp - 2                           # valid rows in flattened space
    Coutp = _round_up(Cout, 128)
    tn = Coutp if Coutp <= 256 else 256       # >=2 Cout blocks for widest convs

    xf = jnp.pad(x.astype(jnp.bfloat16),
                 ((0, 0), (1, 1), (1, 1), (0, 0))).reshape(N, Hp * Wp, C)
    w3 = w2d.astype(jnp.bfloat16).reshape(9, C, Cout)     # tap-major rows
    b2 = bias.astype(jnp.float32).reshape(1, Cout)
    if Coutp != Cout:
        w3 = jnp.pad(w3, ((0, 0), (0, 0), (0, Coutp - Cout)))
        b2 = jnp.pad(b2, ((0, 0), (0, Coutp - Cout)))

    tap_offs = tuple(di * Wp + dj for di in range(3) for dj in range(3))
    est = (2 * Hp * Wp * C * 2 + 2 * 9 * C * tn * 2 + 2 * My * tn * 2
           + My * tn * 4 + 2 * My * C * 2)

    y = pl.pallas_call(
        functools.partial(_conv3x3_kernel, tap_offs=tap_offs, my=My,
                          relu=relu),
        out_shape=jax.ShapeDtypeStruct((N, My, Coutp), jnp.bfloat16),
        grid_spec=pltpu.PrefetchScalarGridSpec(
            num_scalar_prefetch=0,
            grid=(N, Coutp // tn),
            in_specs=[
                pl.BlockSpec((1, Hp * Wp, C), lambda n, c: (n, 0, 0)),
                pl.BlockSpec((9, C, tn), lambda n, c: (0, 0, c)),
                pl.BlockSpec((1, tn), lambda n, c: (0, c)),
            ],
            out_specs=pl.BlockSpec((1, My, tn), lambda n, c: (n, 0, c)),
        ),
        compiler_params=pltpu.CompilerParams(
            dimension_semantics=("parallel", "parallel"),
            vmem_limit_bytes=_vmem_limit(est)),
    )(xf, w3, b2)

    # Un-flatten: row i*Wp + j -> output pixel (i, j); the j >= W columns are
    # wrap-around garbage and are dropped here.
    y = jnp.pad(y, ((0, 0), (0, H * Wp - My), (0, 0)))
    return y.reshape(N, H, Wp, Coutp)[:, :, :W, :Cout]


@functools.partial(jax.jit,
                   static_argnames=("kh", "kw", "stride", "pad", "relu"))
def conv_bn_act(x, w2d, bias, residual=None, *, kh, kw, stride, pad, relu):
    """Conv + folded-BN bias + optional residual add + optional ReLU.

    x: (N, H, W, Cin) bf16.  w2d: (kh*kw*Cin, Cout) bf16 with the BN scale
    already folded into its columns.  bias: (Cout,) f32 (folded BN bias).
    residual: optional (N, Ho, Wo, Cout) added before the ReLU.
    """
    N, H, W, C = x.shape
    Ho = (H + 2 * pad - kh) // stride + 1
    Wo = (W + 2 * pad - kw) // stride + 1

    if kh == 3 and kw == 3 and stride == 1 and pad == 1 and residual is None:
        return _conv3x3_s1_direct(x, w2d, bias, relu)

    if kh == 1 and kw == 1 and pad == 0:
        xs = x[:, ::stride, ::stride, :] if stride > 1 else x
        patches = xs.reshape(N * Ho * Wo, C)
    else:
        # im2col fallback: only the 7x7 stem and the three stride-2 3x3 convs.
        # TODO(synk): tap-accumulate strided convs in-kernel as well.
        xp = jnp.pad(x, ((0, 0), (pad, pad), (pad, pad), (0, 0)))
        cols = []
        for i in range(kh):
            for j in range(kw):
                cols.append(xp[:, i:i + (Ho - 1) * stride + 1:stride,
                               j:j + (Wo - 1) * stride + 1:stride, :])
        patches = jnp.concatenate(cols, axis=-1).reshape(
            N * Ho * Wo, kh * kw * C)

    res2d = None if residual is None else residual.reshape(N * Ho * Wo, -1)
    out = matmul_bias_act(patches, w2d, bias, res2d, relu=relu,
                          out_dtype=jnp.bfloat16)
    return out.reshape(N, Ho, Wo, w2d.shape[1])


@jax.jit
def maxpool_3x3_s2(x):
    """3x3/s2/p1 max-pool.  Memory-bound elementwise max: left to XLA per the
    perf review (a Pallas version only adds an HBM staging round trip)."""
    N, H, W, C = x.shape
    Ho = (H + 2 - 3) // 2 + 1
    Wo = (W + 2 - 3) // 2 + 1
    xp = jnp.pad(x, ((0, 0), (1, 1), (1, 1), (0, 0)),
                 constant_values=-jnp.inf)
    out = None
    for i in range(3):
        for j in range(3):
            tap = xp[:, i:i + (Ho - 1) * 2 + 1:2, j:j + (Wo - 1) * 2 + 1:2, :]
            out = tap if out is None else jnp.maximum(out, tap)
    return out


# ----------------------------------------------------------------------------
# Network
# ----------------------------------------------------------------------------

def bottleneck(x, p, stride):
    """torchvision ResNet Bottleneck (expansion=4), stride in conv2."""
    out = conv_bn_act(x, p["w1"], p["b1"], None,
                      kh=1, kw=1, stride=1, pad=0, relu=True)
    out = conv_bn_act(out, p["w2"], p["b2"], None,
                      kh=3, kw=3, stride=stride, pad=1, relu=True)
    if "wd" in p:
        ident = conv_bn_act(x, p["wd"], p["bd"], None,
                            kh=1, kw=1, stride=stride, pad=0, relu=False)
    else:
        ident = x
    # conv3 + folded bn3 + residual add + relu fused in one matmul epilogue.
    return conv_bn_act(out, p["w3"], p["b3"], ident,
                       kh=1, kw=1, stride=1, pad=0, relu=True)


def forward(params, x_nchw):
    x = jnp.transpose(x_nchw, (0, 2, 3, 1)).astype(jnp.bfloat16)  # NCHW->NHWC
    x = conv_bn_act(x, params["conv1_w"], params["conv1_b"], None,
                    kh=7, kw=7, stride=2, pad=3, relu=True)
    x = maxpool_3x3_s2(x)
    for li, layer in enumerate(params["layers"]):
        for bi, blk in enumerate(layer):
            stride = 2 if (li > 0 and bi == 0) else 1
            x = bottleneck(x, blk, stride)
    # Global avg-pool is a tiny reduce -> XLA; the FC matmul stays in Pallas.
    pooled = jnp.mean(x.astype(jnp.float32), axis=(1, 2))        # (N, 2048)
    logits = matmul_bias_act(pooled, params["fc_w"], params["fc_b"], None,
                             relu=False, out_dtype=jnp.float32)
    return logits


# ----------------------------------------------------------------------------
# Deterministic synthetic parameters (ResNet-152: blocks [3, 8, 36, 3])
# ----------------------------------------------------------------------------

class ParamGen:
    def __init__(self, seed):
        self._key = jax.random.PRNGKey(seed)
        self._n = 0

    def normal(self, shape):
        self._n += 1
        k = jax.random.fold_in(self._key, self._n)
        return jax.random.normal(k, shape, dtype=jnp.float32)


def _conv_bn(gen, kh, kw, cin, cout):
    """Conv weight with BN scale folded into its columns (bf16) + bias (f32)."""
    fan_in = kh * kw * cin
    w = gen.normal((kh, kw, cin, cout)) * jnp.sqrt(2.0 / fan_in)
    w2d = w.reshape(kh * kw * cin, cout)
    gamma = 1.0 + 0.1 * gen.normal((cout,))
    beta = 0.1 * gen.normal((cout,))
    mean = 0.1 * gen.normal((cout,))
    var = 1.0 + 0.1 * jnp.abs(gen.normal((cout,)))
    scale = gamma / jnp.sqrt(var + 1e-5)
    bias = beta - mean * scale
    return (w2d * scale[None, :]).astype(jnp.bfloat16), bias.astype(jnp.float32)


def make_params(seed=0, num_classes=101):
    gen = ParamGen(seed)
    w, b = _conv_bn(gen, 7, 7, 3, 64)
    params = {"conv1_w": w, "conv1_b": b}
    in_c = 64
    layers = []
    for width, n_blocks, first_stride in [(64, 3, 1), (128, 8, 2),
                                          (256, 36, 2), (512, 3, 2)]:
        blocks = []
        for bidx in range(n_blocks):
            s = first_stride if bidx == 0 else 1
            p = {}
            p["w1"], p["b1"] = _conv_bn(gen, 1, 1, in_c, width)
            p["w2"], p["b2"] = _conv_bn(gen, 3, 3, width, width)
            p["w3"], p["b3"] = _conv_bn(gen, 1, 1, width, width * 4)
            if s != 1 or in_c != width * 4:
                p["wd"], p["bd"] = _conv_bn(gen, 1, 1, in_c, width * 4)
            in_c = width * 4
            blocks.append(p)
        layers.append(blocks)
    params["layers"] = layers
    params["fc_w"] = (gen.normal((2048, num_classes)) /
                      jnp.sqrt(2048.0)).astype(jnp.bfloat16)
    params["fc_b"] = (0.01 * gen.normal((num_classes,))).astype(jnp.float32)
    return params


# ----------------------------------------------------------------------------

if __name__ == "__main__":
    key = jax.random.PRNGKey(0)
    # Smallest input whose spatial dims survive the full ResNet-152 stride
    # plan: 32 -> 16 (conv1) -> 8 (maxpool) -> 8 -> 4 -> 2 -> 1.
    x = jax.random.normal(key, (2, 3, 32, 32), dtype=jnp.float32)

    params = make_params(seed=0, num_classes=101)
    logits = forward(params, x)
    logits = jax.block_until_ready(logits)

    assert logits.shape == (2, 101), logits.shape
    assert bool(jnp.all(jnp.isfinite(logits)))
    print("KERNEL_OK")
</pallas_src>

<mosaic_0001>
module attributes {stable_mosaic.version = 11 : i64} {
  func.func @_mm_fused_kernel(%arg0: i32, %arg1: i32, %arg2: i32, %arg3: memref<512x256xbf16, #tpu.memory_space<vmem>>, %arg4: memref<256x128xbf16, #tpu.memory_space<vmem>>, %arg5: memref<1x128xf32, #tpu.memory_space<vmem>>, %arg6: memref<512x128xbf16, #tpu.memory_space<vmem>>, %arg7: memref<512x128xf32, #tpu.memory_space<vmem>>) attributes {dimension_semantics = [#tpu.dimension_semantics<parallel>, #tpu.dimension_semantics<parallel>, #tpu.dimension_semantics<arbitrary>], iteration_bounds = array<i64: 1, 1, 1>, scalar_prefetch = 0 : i64, scratch_operands = 1 : i64, tpu.core_type = #tpu.core_type<tc>, window_params = [{transform_indices = @transform_0, window_bounds = array<i64: 512, 256>}, {transform_indices = @transform_1, window_bounds = array<i64: 256, 128>}, {transform_indices = @transform_2, window_bounds = array<i64: 1, 128>}, {transform_indices = @transform_3, window_bounds = array<i64: 512, 128>}]} {
    %c0_i32 = arith.constant 0 : i32
    %0 = arith.cmpi eq, %arg2, %c0_i32 : i32
    %1 = arith.extui %0 : i1 to i32
    %c0_i32_0 = arith.constant 0 : i32
    %2 = arith.cmpi ne, %1, %c0_i32_0 : i32
    scf.if %2 {
      %cst_10 = arith.constant 0.000000e+00 : f32
      %12 = vector.broadcast %cst_10 : f32 to vector<512x128xf32>
      %c0_11 = arith.constant 0 : index
      %c0_12 = arith.constant 0 : index
      %13 = vector.load %arg7[%c0_11, %c0_12] : memref<512x128xf32, #tpu.memory_space<vmem>>, vector<512x128xf32>
      tpu.vector_store %arg7[%c0_11, %c0_12], %12 {strides = array<i32>} : memref<512x128xf32, #tpu.memory_space<vmem>>, vector<512x128xf32>,
    } else {
    }
    %c0 = arith.constant 0 : index
    %c0_1 = arith.constant 0 : index
    %3 = vector.load %arg7[%c0, %c0_1] : memref<512x128xf32, #tpu.memory_space<vmem>>, vector<512x128xf32>
    %c0_2 = arith.constant 0 : index
    %c0_3 = arith.constant 0 : index
    %4 = vector.load %arg3[%c0_2, %c0_3] : memref<512x256xbf16, #tpu.memory_space<vmem>>, vector<512x256xbf16>
    %c0_4 = arith.constant 0 : index
    %c0_5 = arith.constant 0 : index
    %5 = vector.load %arg4[%c0_4, %c0_5] : memref<256x128xbf16, #tpu.memory_space<vmem>>, vector<256x128xbf16>
    %cst = arith.constant dense<0.000000e+00> : vector<512x128xf32>
    %6 = tpu.matmul %4, %5, %cst {dimension_numbers = #tpu.dot_dimension_numbers<[1], [0], [0], [1], [0, 0, 1, 1], [], []>} : vector<512x256xbf16>, vector<256x128xbf16>, vector<512x128xf32> -> vector<512x128xf32>
    %7 = arith.addf %3, %6 : vector<512x128xf32>
    %c0_6 = arith.constant 0 : index
    %c0_7 = arith.constant 0 : index
    %8 = vector.load %arg7[%c0_6, %c0_7] : memref<512x128xf32, #tpu.memory_space<vmem>>, vector<512x128xf32>
    tpu.vector_store %arg7[%c0_6, %c0_7], %7 {strides = array<i32>} : memref<512x128xf32, #tpu.memory_space<vmem>>, vector<512x128xf32>,
    %c0_i32_8 = arith.constant 0 : i32
    %9 = arith.cmpi eq, %arg2, %c0_i32_8 : i32
    %10 = arith.extui %9 : i1 to i32
    %c0_i32_9 = arith.constant 0 : i32
    %11 = arith.cmpi ne, %10, %c0_i32_9 : i32
    scf.if %11 {
      %c0_10 = arith.constant 0 : index
      %c0_11 = arith.constant 0 : index
      %12 = vector.load %arg7[%c0_10, %c0_11] : memref<512x128xf32, #tpu.memory_space<vmem>>, vector<512x128xf32>
      %c0_12 = arith.constant 0 : index
      %c0_13 = arith.constant 0 : index
      %13 = vector.load %arg5[%c0_12, %c0_13] : memref<1x128xf32, #tpu.memory_space<vmem>>, vector<1x128xf32>
      %14 = vector.broadcast %13 : vector<1x128xf32> to vector<512x128xf32>
      %15 = arith.addf %12, %14 : vector<512x128xf32>
      %cst_14 = arith.constant 0.000000e+00 : f32
      %16 = vector.broadcast %cst_14 : f32 to vector<512x128xf32>
      %17 = arith.maximumf %15, %16 : vector<512x128xf32>
      %18 = arith.truncf %17 : vector<512x128xf32> to vector<512x128xbf16>
      %c0_15 = arith.constant 0 : index
      %c0_16 = arith.constant 0 : index
      %19 = vector.load %arg6[%c0_15, %c0_16] : memref<512x128xbf16, #tpu.memory_space<vmem>>, vector<512x128xbf16>
      tpu.vector_store %arg6[%c0_15, %c0_16], %18 {strides = array<i32>} : memref<512x128xbf16, #tpu.memory_space<vmem>>, vector<512x128xbf16>,
    } else {
    }
    return
  }
  func.func @transform_0(%arg0: i32, %arg1: i32, %arg2: i32) -> (i32, i32) {
    %c0_i32 = arith.constant 0 : i32
    return %arg0, %arg2 : i32, i32
  }
  func.func @transform_1(%arg0: i32, %arg1: i32, %arg2: i32) -> (i32, i32) {
    %c0_i32 = arith.constant 0 : i32
    return %arg2, %arg1 : i32, i32
  }
  func.func @transform_2(%arg0: i32, %arg1: i32, %arg2: i32) -> (i32, i32) {
    %c0_i32 = arith.constant 0 : i32
    %c0_i32_0 = arith.constant 0 : i32
    return %c0_i32, %arg1 : i32, i32
  }
  func.func @transform_3(%arg0: i32, %arg1: i32, %arg2: i32) -> (i32, i32) {
    %c0_i32 = arith.constant 0 : i32
    return %arg0, %arg1 : i32, i32
  }
}

</mosaic_0001>

<llo_original>
// kernel: matmul_bias_act.1
$region0: #{matmul_bias_act.1}
  #allocation0 [shape = 'u32[]', space=smem, size = 0x4, offset = 0x4, fixed_abs, tag = 'smem constant byte address 0x4 - core index']
  #allocation1 [shape = 'u32[144,128]{1,0:T(1,128)}', space=vmem, size = 0x12000, scoped, tag = 'internal scratch']
  #allocation2 [shape = 'f32[512,128]{1,0:T(8,128)}', space=vmem, size = 0x40000, scoped, tag = 'scratch operand']
  %s0 = inlined_call_operand.vmem [shape: bf16[512,256], index: 0, kind: input, shape index: {}]
  %s1 = inlined_call_operand.vmem [shape: bf16[256,128], index: 1, kind: input, shape index: {}]
  %s2 = inlined_call_operand.vmem [shape: f32[1,128], index: 2, kind: input, shape index: {}]
  %s3 = inlined_call_operand.vmem [shape: bf16[512,128], index: 3, kind: output, shape index: {}]
  %s4 = sld [smem:[#allocation0]]
  $region30: #{matmul_bias_act.1} parent=0
    _
  %s6 = ssub.s32 1, %s4
  %s7 = scalar_select 0, %s6, %s4
  // Predicated region
  $region2: #{matmul_bias_act.1} parent=0 // pred_check
    _
  $region3: #{matmul_bias_act.1} parent=0 // pred_check_branch
    %9 = sbr.rel (0) target = $region5
  $region4: #{matmul_bias_act.1} parent=0 // pred_region
    _
  $region5: #{matmul_bias_act.1} parent=0 // pred_fallthru
    _
  // Predicated region
  $region6: #{matmul_bias_act.1} parent=0 // pred_check
    _
  $region7: #{matmul_bias_act.1} parent=0 // pred_check_branch
    %11 = sbr.rel (0) target = $region9
  $region8: #{matmul_bias_act.1} parent=0 // pred_region
    _
  $region9: #{matmul_bias_act.1} parent=0 // pred_fallthru
    _
  // Predicated region
  $region10: #{matmul_bias_act.1} parent=0 // pred_check
    _
  $region11: #{matmul_bias_act.1} parent=0 // pred_check_branch
    %13 = sbr.rel (0) target = $region13
  $region12: #{matmul_bias_act.1} parent=0 // pred_region
    _
  $region13: #{matmul_bias_act.1} parent=0 // pred_fallthru
    _
  %p15 = scmp.eq.s32.totalorder 0, 0
  // Predicated region
  $region14: #{matmul_bias_act.1} parent=0 // pred_check
    %p16 = pneg %p15
  $region15: #{matmul_bias_act.1} parent=0 // pred_check_branch
    %18 = sbr.rel (%p16) target = $region17
  $region16: #{matmul_bias_act.1} parent=0 // pred_region
    %19 = vst [vmem:[#allocation2] sm:$0xff] 0.0
    %20 = vst [vmem:[#allocation2 + $0x8] sm:$0xff] 0.0
    %21 = vst [vmem:[#allocation2 + $0x10] sm:$0xff] 0.0
    %22 = vst [vmem:[#allocation2 + $0x18] sm:$0xff] 0.0
    %23 = vst [vmem:[#allocation2 + $0x20] sm:$0xff] 0.0
    %24 = vst [vmem:[#allocation2 + $0x28] sm:$0xff] 0.0
    %25 = vst [vmem:[#allocation2 + $0x30] sm:$0xff] 0.0
    %26 = vst [vmem:[#allocation2 + $0x38] sm:$0xff] 0.0
    %27 = vst [vmem:[#allocation2 + $0x40] sm:$0xff] 0.0
    %28 = vst [vmem:[#allocation2 + $0x48] sm:$0xff] 0.0
    %29 = vst [vmem:[#allocation2 + $0x50] sm:$0xff] 0.0
    %30 = vst [vmem:[#allocation2 + $0x58] sm:$0xff] 0.0
    %31 = vst [vmem:[#allocation2 + $0x60] sm:$0xff] 0.0
    %32 = vst [vmem:[#allocation2 + $0x68] sm:$0xff] 0.0
    %33 = vst [vmem:[#allocation2 + $0x70] sm:$0xff] 0.0
    %34 = vst [vmem:[#allocation2 + $0x78] sm:$0xff] 0.0
    %35 = vst [vmem:[#allocation2 + $0x80] sm:$0xff] 0.0
    %36 = vst [vmem:[#allocation2 + $0x88] sm:$0xff] 0.0
    %37 = vst [vmem:[#allocation2 + $0x90] sm:$0xff] 0.0
    %38 = vst [vmem:[#allocation2 + $0x98] sm:$0xff] 0.0
    %39 = vst [vmem:[#allocation2 + $0xa0] sm:$0xff] 0.0
    %40 = vst [vmem:[#allocation2 + $0xa8] sm:$0xff] 0.0
    %41 = vst [vmem:[#allocation2 + $0xb0] sm:$0xff] 0.0
    %42 = vst [vmem:[#allocation2 + $0xb8] sm:$0xff] 0.0
    %43 = vst [vmem:[#allocation2 + $0xc0] sm:$0xff] 0.0
    %44 = vst [vmem:[#allocation2 + $0xc8] sm:$0xff] 0.0
    %45 = vst [vmem:[#allocation2 + $0xd0] sm:$0xff] 0.0
    %46 = vst [vmem:[#allocation2 + $0xd8] sm:$0xff] 0.0
    %47 = vst [vmem:[#allocation2 + $0xe0] sm:$0xff] 0.0
    %48 = vst [vmem:[#allocation2 + $0xe8] sm:$0xff] 0.0
    %49 = vst [vmem:[#allocation2 + $0xf0] sm:$0xff] 0.0
    %50 = vst [vmem:[#allocation2 + $0xf8] sm:$0xff] 0.0
    %51 = vst [vmem:[#allocation2 + $0x100] sm:$0xff] 0.0
    %52 = vst [vmem:[#allocation2 + $0x108] sm:$0xff] 0.0
    %53 = vst [vmem:[#allocation2 + $0x110] sm:$0xff] 0.0
    %54 = vst [vmem:[#allocation2 + $0x118] sm:$0xff] 0.0
    %55 = vst [vmem:[#allocation2 + $0x120] sm:$0xff] 0.0
    %56 = vst [vmem:[#allocation2 + $0x128] sm:$0xff] 0.0
    %57 = vst [vmem:[#allocation2 + $0x130] sm:$0xff] 0.0
    %58 = vst [vmem:[#allocation2 + $0x138] sm:$0xff] 0.0
    %59 = vst [vmem:[#allocation2 + $0x140] sm:$0xff] 0.0
    %60 = vst [vmem:[#allocation2 + $0x148] sm:$0xff] 0.0
    %61 = vst [vmem:[#allocation2 + $0x150] sm:$0xff] 0.0
    %62 = vst [vmem:[#allocation2 + $0x158] sm:$0xff] 0.0
    %63 = vst [vmem:[#allocation2 + $0x160] sm:$0xff] 0.0
    %64 = vst [vmem:[#allocation2 + $0x168] sm:$0xff] 0.0
    %65 = vst [vmem:[#allocation2 + $0x170] sm:$0xff] 0.0
    %66 = vst [vmem:[#allocation2 + $0x178] sm:$0xff] 0.0
    %67 = vst [vmem:[#allocation2 + $0x180] sm:$0xff] 0.0
    %68 = vst [vmem:[#allocation2 + $0x188] sm:$0xff] 0.0
    %69 = vst [vmem:[#allocation2 + $0x190] sm:$0xff] 0.0
    %70 = vst [vmem:[#allocation2 + $0x198] sm:$0xff] 0.0
    %71 = vst [vmem:[#allocation2 + $0x1a0] sm:$0xff] 0.0
    %72 = vst [vmem:[#allocation2 + $0x1a8] sm:$0xff] 0.0
    %73 = vst [vmem:[#allocation2 + $0x1b0] sm:$0xff] 0.0
    %74 = vst [vmem:[#allocation2 + $0x1b8] sm:$0xff] 0.0
    %75 = vst [vmem:[#allocation2 + $0x1c0] sm:$0xff] 0.0
    %76 = vst [vmem:[#allocation2 + $0x1c8] sm:$0xff] 0.0
    %77 = vst [vmem:[#allocation2 + $0x1d0] sm:$0xff] 0.0
    %78 = vst [vmem:[#allocation2 + $0x1d8] sm:$0xff] 0.0
    %79 = vst [vmem:[#allocation2 + $0x1e0] sm:$0xff] 0.0
    %80 = vst [vmem:[#allocation2 + $0x1e8] sm:$0xff] 0.0
    %81 = vst [vmem:[#allocation2 + $0x1f0] sm:$0xff] 0.0
    %82 = vst [vmem:[#allocation2 + $0x1f8] sm:$0xff] 0.0
  $region17: #{matmul_bias_act.1} parent=0 // pred_fallthru
    _
  %v83 = vld [vmem:[#allocation2] sm:$0xff]
  %v84 = vld [vmem:[#allocation2 + $0x8] sm:$0xff]
  %v85 = vld [vmem:[#allocation2 + $0x10] sm:$0xff]
  %v86 = vld [vmem:[#allocation2 + $0x18] sm:$0xff]
  %v87 = vld [vmem:[#allocation2 + $0x20] sm:$0xff]
  %v88 = vld [vmem:[#allocation2 + $0x28] sm:$0xff]
  %v89 = vld [vmem:[#allocation2 + $0x30] sm:$0xff]
  %v90 = vld [vmem:[#allocation2 + $0x38] sm:$0xff]
  %v91 = vld [vmem:[#allocation2 + $0x40] sm:$0xff]
  %v92 = vld [vmem:[#allocation2 + $0x48] sm:$0xff]
  %v93 = vld [vmem:[#allocation2 + $0x50] sm:$0xff]
  %v94 = vld [vmem:[#allocation2 + $0x58] sm:$0xff]
  %v95 = vld [vmem:[#allocation2 + $0x60] sm:$0xff]
  %v96 = vld [vmem:[#allocation2 + $0x68] sm:$0xff]
  %v97 = vld [vmem:[#allocation2 + $0x70] sm:$0xff]
  %v98 = vld [vmem:[#allocation2 + $0x78] sm:$0xff]
  %v99 = vld [vmem:[#allocation2 + $0x80] sm:$0xff]
  %v100 = vld [vmem:[#allocation2 + $0x88] sm:$0xff]
  %v101 = vld [vmem:[#allocation2 + $0x90] sm:$0xff]
  %v102 = vld [vmem:[#allocation2 + $0x98] sm:$0xff]
  %v103 = vld [vmem:[#allocation2 + $0xa0] sm:$0xff]
  %v104 = vld [vmem:[#allocation2 + $0xa8] sm:$0xff]
  %v105 = vld [vmem:[#allocation2 + $0xb0] sm:$0xff]
  %v106 = vld [vmem:[#allocation2 + $0xb8] sm:$0xff]
  %v107 = vld [vmem:[#allocation2 + $0xc0] sm:$0xff]
  %v108 = vld [vmem:[#allocation2 + $0xc8] sm:$0xff]
  %v109 = vld [vmem:[#allocation2 + $0xd0] sm:$0xff]
  %v110 = vld [vmem:[#allocation2 + $0xd8] sm:$0xff]
  %v111 = vld [vmem:[#allocation2 + $0xe0] sm:$0xff]
  %v112 = vld [vmem:[#allocation2 + $0xe8] sm:$0xff]
  %v113 = vld [vmem:[#allocation2 + $0xf0] sm:$0xff]
  %v114 = vld [vmem:[#allocation2 + $0xf8] sm:$0xff]
  %v115 = vld [vmem:[#allocation2 + $0x100] sm:$0xff]
  %v116 = vld [vmem:[#allocation2 + $0x108] sm:$0xff]
  %v117 = vld [vmem:[#allocation2 + $0x110] sm:$0xff]
  %v118 = vld [vmem:[#allocation2 + $0x118] sm:$0xff]
  %v119 = vld [vmem:[#allocation2 + $0x120] sm:$0xff]
  %v120 = vld [vmem:[#allocation2 + $0x128] sm:$0xff]
  %v121 = vld [vmem:[#allocation2 + $0x130] sm:$0xff]
  %v122 = vld [vmem:[#allocation2 + $0x138] sm:$0xff]
  %v123 = vld [vmem:[#allocation2 + $0x140] sm:$0xff]
  %v124 = vld [vmem:[#allocation2 + $0x148] sm:$0xff]
  %v125 = vld [vmem:[#allocation2 + $0x150] sm:$0xff]
  %v126 = vld [vmem:[#allocation2 + $0x158] sm:$0xff]
  %v127 = vld [vmem:[#allocation2 + $0x160] sm:$0xff]
  %v128 = vld [vmem:[#allocation2 + $0x168] sm:$0xff]
  %v129 = vld [vmem:[#allocation2 + $0x170] sm:$0xff]
  %v130 = vld [vmem:[#allocation2 + $0x178] sm:$0xff]
  %v131 = vld [vmem:[#allocation2 + $0x180] sm:$0xff]
  %v132 = vld [vmem:[#allocation2 + $0x188] sm:$0xff]
  %v133 = vld [vmem:[#allocation2 + $0x190] sm:$0xff]
  %v134 = vld [vmem:[#allocation2 + $0x198] sm:$0xff]
  %v135 = vld [vmem:[#allocation2 + $0x1a0] sm:$0xff]
  %v136 = vld [vmem:[#allocation2 + $0x1a8] sm:$0xff]
  %v137 = vld [vmem:[#allocation2 + $0x1b0] sm:$0xff]
  %v138 = vld [vmem:[#allocation2 + $0x1b8] sm:$0xff]
  %v139 = vld [vmem:[#allocation2 + $0x1c0] sm:$0xff]
  %v140 = vld [vmem:[#allocation2 + $0x1c8] sm:$0xff]
  %v141 = vld [vmem:[#allocation2 + $0x1d0] sm:$0xff]
  %v142 = vld [vmem:[#allocation2 + $0x1d8] sm:$0xff]
  %v143 = vld [vmem:[#allocation2 + $0x1e0] sm:$0xff]
  %v144 = vld [vmem:[#allocation2 + $0x1e8] sm:$0xff]
  %v145 = vld [vmem:[#allocation2 + $0x1f0] sm:$0xff]
  %v146 = vld [vmem:[#allocation2 + $0x1f8] sm:$0xff]
  %v147 = vld [vmem:[%s0] sm:$0xff]
  %v148 = vld [vmem:[%s0 + $0x8] sm:$0xff]
  %v149 = vld [vmem:[%s0 + $0x10] sm:$0xff]
  %v150 = vld [vmem:[%s0 + $0x18] sm:$0xff]
  %v151 = vld [vmem:[%s0 + $0x20] sm:$0xff]
  %v152 = vld [vmem:[%s0 + $0x28] sm:$0xff]
  %v153 = vld [vmem:[%s0 + $0x30] sm:$0xff]
  %v154 = vld [vmem:[%s0 + $0x38] sm:$0xff]
  %v155 = vld [vmem:[%s0 + $0x40] sm:$0xff]
  %v156 = vld [vmem:[%s0 + $0x48] sm:$0xff]
  %v157 = vld [vmem:[%s0 + $0x50] sm:$0xff]
  %v158 = vld [vmem:[%s0 + $0x58] sm:$0xff]
  %v159 = vld [vmem:[%s0 + $0x60] sm:$0xff]
  %v160 = vld [vmem:[%s0 + $0x68] sm:$0xff]
  %v161 = vld [vmem:[%s0 + $0x70] sm:$0xff]
  %v162 = vld [vmem:[%s0 + $0x78] sm:$0xff]
  %v163 = vld [vmem:[%s0 + $0x80] sm:$0xff]
  %v164 = vld [vmem:[%s0 + $0x88] sm:$0xff]
  %v165 = vld [vmem:[%s0 + $0x90] sm:$0xff]
  %v166 = vld [vmem:[%s0 + $0x98] sm:$0xff]
  %v167 = vld [vmem:[%s0 + $0xa0] sm:$0xff]
  %v168 = vld [vmem:[%s0 + $0xa8] sm:$0xff]
  %v169 = vld [vmem:[%s0 + $0xb0] sm:$0xff]
  %v170 = vld [vmem:[%s0 + $0xb8] sm:$0xff]
  %v171 = vld [vmem:[%s0 + $0xc0] sm:$0xff]
  %v172 = vld [vmem:[%s0 + $0xc8] sm:$0xff]
  %v173 = vld [vmem:[%s0 + $0xd0] sm:$0xff]
  %v174 = vld [vmem:[%s0 + $0xd8] sm:$0xff]
  %v175 = vld [vmem:[%s0 + $0xe0] sm:$0xff]
  %v176 = vld [vmem:[%s0 + $0xe8] sm:$0xff]
  %v177 = vld [vmem:[%s0 + $0xf0] sm:$0xff]
  %v178 = vld [vmem:[%s0 + $0xf8] sm:$0xff]
  %v179 = vld [vmem:[%s0 + $0x100] sm:$0xff]
  %v180 = vld [vmem:[%s0 + $0x108] sm:$0xff]
  %v181 = vld [vmem:[%s0 + $0x110] sm:$0xff]
  %v182 = vld [vmem:[%s0 + $0x118] sm:$0xff]
  %v183 = vld [vmem:[%s0 + $0x120] sm:$0xff]
  %v184 = vld [vmem:[%s0 + $0x128] sm:$0xff]
  %v185 = vld [vmem:[%s0 + $0x130] sm:$0xff]
  %v186 = vld [vmem:[%s0 + $0x138] sm:$0xff]
  %v187 = vld [vmem:[%s0 + $0x140] sm:$0xff]
  %v188 = vld [vmem:[%s0 + $0x148] sm:$0xff]
  %v189 = vld [vmem:[%s0 + $0x150] sm:$0xff]
  %v190 = vld [vmem:[%s0 + $0x158] sm:$0xff]
  %v191 = vld [vmem:[%s0 + $0x160] sm:$0xff]
  %v192 = vld [vmem:[%s0 + $0x168] sm:$0xff]
  %v193 = vld [vmem:[%s0 + $0x170] sm:$0xff]
  %v194 = vld [vmem:[%s0 + $0x178] sm:$0xff]
  %v195 = vld [vmem:[%s0 + $0x180] sm:$0xff]
  %v196 = vld [vmem:[%s0 + $0x188] sm:$0xff]
  %v197 = vld [vmem:[%s0 + $0x190] sm:$0xff]
  %v198 = vld [vmem:[%s0 + $0x198] sm:$0xff]
  %v199 = vld [vmem:[%s0 + $0x1a0] sm:$0xff]
  %v200 = vld [vmem:[%s0 + $0x1a8] sm:$0xff]
  %v201 = vld [vmem:[%s0 + $0x1b0] sm:$0xff]
  %v202 = vld [vmem:[%s0 + $0x1b8] sm:$0xff]
  %v203 = vld [vmem:[%s0 + $0x1c0] sm:$0xff]
  %v204 = vld [vmem:[%s0 + $0x1c8] sm:$0xff]
  %v205 = vld [vmem:[%s0 + $0x1d0] sm:$0xff]
  %v206 = vld [vmem:[%s0 + $0x1d8] sm:$0xff]
  %v207 = vld [vmem:[%s0 + $0x1e0] sm:$0xff]
  %v208 = vld [vmem:[%s0 + $0x1e8] sm:$0xff]
  %v209 = vld [vmem:[%s0 + $0x1f0] sm:$0xff]
  %v210 = vld [vmem:[%s0 + $0x1f8] sm:$0xff]
  %v211 = vld [vmem:[%s1] sm:$0xf]
  %v212 = vld [vmem:[%s1 + $0x4] sm:$0xf]
  %v213 = vld [vmem:[%s1 + $0x8] sm:$0xf]
  %v214 = vld [vmem:[%s1 + $0xc] sm:$0xf]
  %v215 = vld [vmem:[%s1 + $0x10] sm:$0xf]
  %v216 = vld [vmem:[%s1 + $0x14] sm:$0xf]
  %v217 = vld [vmem:[%s1 + $0x18] sm:$0xf]
  %v218 = vld [vmem:[%s1 + $0x1c] sm:$0xf]
  %v219 = vld [vmem:[%s1 + $0x20] sm:$0xf]
  %v220 = vld [vmem:[%s1 + $0x24] sm:$0xf]
  %v221 = vld [vmem:[%s1 + $0x28] sm:$0xf]
  %v222 = vld [vmem:[%s1 + $0x2c] sm:$0xf]
  %v223 = vld [vmem:[%s1 + $0x30] sm:$0xf]
  %v224 = vld [vmem:[%s1 + $0x34] sm:$0xf]
  %v225 = vld [vmem:[%s1 + $0x38] sm:$0xf]
  %v226 = vld [vmem:[%s1 + $0x3c] sm:$0xf]
  %v227 = vld [vmem:[%s1 + $0x40] sm:$0xf]
  %v228 = vld [vmem:[%s1 + $0x44] sm:$0xf]
  %v229 = vld [vmem:[%s1 + $0x48] sm:$0xf]
  %v230 = vld [vmem:[%s1 + $0x4c] sm:$0xf]
  %v231 = vld [vmem:[%s1 + $0x50] sm:$0xf]
  %v232 = vld [vmem:[%s1 + $0x54] sm:$0xf]
  %v233 = vld [vmem:[%s1 + $0x58] sm:$0xf]
  %v234 = vld [vmem:[%s1 + $0x5c] sm:$0xf]
  %v235 = vld [vmem:[%s1 + $0x60] sm:$0xf]
  %v236 = vld [vmem:[%s1 + $0x64] sm:$0xf]
  %v237 = vld [vmem:[%s1 + $0x68] sm:$0xf]
  %v238 = vld [vmem:[%s1 + $0x6c] sm:$0xf]
  %v239 = vld [vmem:[%s1 + $0x70] sm:$0xf]
  %v240 = vld [vmem:[%s1 + $0x74] sm:$0xf]
  %v241 = vld [vmem:[%s1 + $0x78] sm:$0xf]
  %v242 = vld [vmem:[%s1 + $0x7c] sm:$0xf]
  %v307 = vunpack.c.l.b16 %v147
  %v308 = vunpack.c.h.b16 %v147
  %v309 = vunpack.c.l.b16 %v148
  %v310 = vunpack.c.h.b16 %v148
  %v311 = vunpack.c.l.b16 %v149
  %v312 = vunpack.c.h.b16 %v149
  %v313 = vunpack.c.l.b16 %v150
  %v314 = vunpack.c.h.b16 %v150
  %v315 = vunpack.c.l.b16 %v151
  %v316 = vunpack.c.h.b16 %v151
  %v317 = vunpack.c.l.b16 %v152
  %v318 = vunpack.c.h.b16 %v152
  %v319 = vunpack.c.l.b16 %v153
  %v320 = vunpack.c.h.b16 %v153
  %v321 = vunpack.c.l.b16 %v154
  %v322 = vunpack.c.h.b16 %v154
  %v323 = vunpack.c.l.b16 %v155
  %v324 = vunpack.c.h.b16 %v155
  %v325 = vunpack.c.l.b16 %v156
  %v326 = vunpack.c.h.b16 %v156
  %v327 = vunpack.c.l.b16 %v157
  %v328 = vunpack.c.h.b16 %v157
  %v329 = vunpack.c.l.b16 %v158
  %v330 = vunpack.c.h.b16 %v158
  %v331 = vunpack.c.l.b16 %v159
  %v332 = vunpack.c.h.b16 %v159
  %v333 = vunpack.c.l.b16 %v160
  %v334 = vunpack.c.h.b16 %v160
  %v335 = vunpack.c.l.b16 %v161
  %v336 = vunpack.c.h.b16 %v161
  %v337 = vunpack.c.l.b16 %v162
  %v338 = vunpack.c.h.b16 %v162
  %v339 = vunpack.c.l.b16 %v163
  %v340 = vunpack.c.h.b16 %v163
  %v341 = vunpack.c.l.b16 %v164
  %v342 = vunpack.c.h.b16 %v164
  %v343 = vunpack.c.l.b16 %v165
  %v344 = vunpack.c.h.b16 %v165
  %v345 = vunpack.c.l.b16 %v166
  %v346 = vunpack.c.h.b16 %v166
  %v347 = vunpack.c.l.b16 %v167
  %v348 = vunpack.c.h.b16 %v167
  %v349 = vunpack.c.l.b16 %v168
  %v350 = vunpack.c.h.b16 %v168
  %v351 = vunpack.c.l.b16 %v169
  %v352 = vunpack.c.h.b16 %v169
  %v353 = vunpack.c.l.b16 %v170
  %v354 = vunpack.c.h.b16 %v170
  %v355 = vunpack.c.l.b16 %v171
  %v356 = vunpack.c.h.b16 %v171
  %v357 = vunpack.c.l.b16 %v172
  %v358 = vunpack.c.h.b16 %v172
  %v359 = vunpack.c.l.b16 %v173
  %v360 = vunpack.c.h.b16 %v173
  %v361 = vunpack.c.l.b16 %v174
  %v362 = vunpack.c.h.b16 %v174
  %v363 = vunpack.c.l.b16 %v175
  %v364 = vunpack.c.h.b16 %v175
  %v365 = vunpack.c.l.b16 %v176
  %v366 = vunpack.c.h.b16 %v176
  %v367 = vunpack.c.l.b16 %v177
  %v368 = vunpack.c.h.b16 %v177
  %v369 = vunpack.c.l.b16 %v178
  %v370 = vunpack.c.h.b16 %v178
  %v371 = vunpack.c.l.b16 %v179
  %v372 = vunpack.c.h.b16 %v179
  %v373 = vunpack.c.l.b16 %v180
  %v374 = vunpack.c.h.b16 %v180
  %v375 = vunpack.c.l.b16 %v181
  %v376 = vunpack.c.h.b16 %v181
  %v377 = vunpack.c.l.b16 %v182
  %v378 = vunpack.c.h.b16 %v182
  %v379 = vunpack.c.l.b16 %v183
  %v380 = vunpack.c.h.b16 %v183
  %v381 = vunpack.c.l.b16 %v184
  %v382 = vunpack.c.h.b16 %v184
  %v383 = vunpack.c.l.b16 %v185
  %v384 = vunpack.c.h.b16 %v185
  %v385 = vunpack.c.l.b16 %v186
  %v386 = vunpack.c.h.b16 %v186
  %v387 = vunpack.c.l.b16 %v187
  %v388 = vunpack.c.h.b16 %v187
  %v389 = vunpack.c.l.b16 %v188
  %v390 = vunpack.c.h.b16 %v188
  %v391 = vunpack.c.l.b16 %v189
  %v392 = vunpack.c.h.b16 %v189
  %v393 = vunpack.c.l.b16 %v190
  %v394 = vunpack.c.h.b16 %v190
  %v395 = vunpack.c.l.b16 %v191
  %v396 = vunpack.c.h.b16 %v191
  %v397 = vunpack.c.l.b16 %v192
  %v398 = vunpack.c.h.b16 %v192
  %v399 = vunpack.c.l.b16 %v193
  %v400 = vunpack.c.h.b16 %v193
  %v401 = vunpack.c.l.b16 %v194
  %v402 = vunpack.c.h.b16 %v194
  %v403 = vunpack.c.l.b16 %v195
  %v404 = vunpack.c.h.b16 %v195
  %v405 = vunpack.c.l.b16 %v196
  %v406 = vunpack.c.h.b16 %v196
  %v407 = vunpack.c.l.b16 %v197
  %v408 = vunpack.c.h.b16 %v197
  %v409 = vunpack.c.l.b16 %v198
  %v410 = vunpack.c.h.b16 %v198
  %v411 = vunpack.c.l.b16 %v199
  %v412 = vunpack.c.h.b16 %v199
  %v413 = vunpack.c.l.b16 %v200
  %v414 = vunpack.c.h.b16 %v200
  %v415 = vunpack.c.l.b16 %v201
  %v416 = vunpack.c.h.b16 %v201
  %v417 = vunpack.c.l.b16 %v202
  %v418 = vunpack.c.h.b16 %v202
  %v419 = vunpack.c.l.b16 %v203
  %v420 = vunpack.c.h.b16 %v203
  %v421 = vunpack.c.l.b16 %v204
  %v422 = vunpack.c.h.b16 %v204
  %v423 = vunpack.c.l.b16 %v205
  %v424 = vunpack.c.h.b16 %v205
  %v425 = vunpack.c.l.b16 %v206
  %v426 = vunpack.c.h.b16 %v206
  %v427 = vunpack.c.l.b16 %v207
  %v428 = vunpack.c.h.b16 %v207
  %v429 = vunpack.c.l.b16 %v208
  %v430 = vunpack.c.h.b16 %v208
  %v431 = vunpack.c.l.b16 %v209
  %v432 = vunpack.c.h.b16 %v209
  %v433 = vunpack.c.l.b16 %v210
  %v434 = vunpack.c.h.b16 %v210
  %v435 = vpack.c.b16 %v309, %v307
  %v436 = vpack.c.b16 %v310, %v308
  %v437 = vpack.c.b16 %v313, %v311
  %v438 = vpack.c.b16 %v314, %v312
  %v439 = vpack.c.b16 %v317, %v315
  %v440 = vpack.c.b16 %v318, %v316
  %v441 = vpack.c.b16 %v321, %v319
  %v442 = vpack.c.b16 %v322, %v320
  %v443 = vpack.c.b16 %v325, %v323
  %v444 = vpack.c.b16 %v326, %v324
  %v445 = vpack.c.b16 %v329, %v327
  %v446 = vpack.c.b16 %v330, %v328
  %v447 = vpack.c.b16 %v333, %v331
  %v448 = vpack.c.b16 %v334, %v332
  %v449 = vpack.c.b16 %v337, %v335
  %v450 = vpack.c.b16 %v338, %v336
  %v451 = vpack.c.b16 %v341, %v339
  %v452 = vpack.c.b16 %v342, %v340
  %v453 = vpack.c.b16 %v345, %v343
  %v454 = vpack.c.b16 %v346, %v344
  %v455 = vpack.c.b16 %v349, %v347
  %v456 = vpack.c.b16 %v350, %v348
  %v457 = vpack.c.b16 %v353, %v351
  %v458 = vpack.c.b16 %v354, %v352
  %v459 = vpack.c.b16 %v357, %v355
  %v460 = vpack.c.b16 %v358, %v356
  %v461 = vpack.c.b16 %v361, %v359
  %v462 = vpack.c.b16 %v362, %v360
  %v463 = vpack.c.b16 %v365, %v363
  %v464 = vpack.c.b16 %v366, %v364
  %v465 = vpack.c.b16 %v369, %v367
  %v466 = vpack.c.b16 %v370, %v368
  %v467 = vpack.c.b16 %v373, %v371
  %v468 = vpack.c.b16 %v374, %v372
  %v469 = vpack.c.b16 %v377, %v375
  %v470 = vpack.c.b16 %v378, %v376
  %v471 = vpack.c.b16 %v381, %v379
  %v472 = vpack.c.b16 %v382, %v380
  %v473 = vpack.c.b16 %v385, %v383
  %v474 = vpack.c.b16 %v386, %v384
  %v475 = vpack.c.b16 %v389, %v387
  %v476 = vpack.c.b16 %v390, %v388
  %v477 = vpack.c.b16 %v393, %v391
  %v478 = vpack.c.b16 %v394, %v392
  %v479 = vpack.c.b16 %v397, %v395
  %v480 = vpack.c.b16 %v398, %v396
  %v481 = vpack.c.b16 %v401, %v399
  %v482 = vpack.c.b16 %v402, %v400
  %v483 = vpack.c.b16 %v405, %v403
  %v484 = vpack.c.b16 %v406, %v404
  %v485 = vpack.c.b16 %v409, %v407
  %v486 = vpack.c.b16 %v410, %v408
  %v487 = vpack.c.b16 %v413, %v411
  %v488 = vpack.c.b16 %v414, %v412
  %v489 = vpack.c.b16 %v417, %v415
  %v490 = vpack.c.b16 %v418, %v416
  %v491 = vpack.c.b16 %v421, %v419
  %v492 = vpack.c.b16 %v422, %v420
  %v493 = vpack.c.b16 %v425, %v423
  %v494 = vpack.c.b16 %v426, %v424
  %v495 = vpack.c.b16 %v429, %v427
  %v496 = vpack.c.b16 %v430, %v428
  %v497 = vpack.c.b16 %v433, %v431
  %v498 = vpack.c.b16 %v434, %v432
  %v595 = vunpack.c.l.b16 %v211
  %v596 = vunpack.c.l.b16 %v212
  %v597 = vunpack.c.l.b16 %v213
  %v598 = vunpack.c.l.b16 %v214
  %v599 = vunpack.c.l.b16 %v215
  %v600 = vunpack.c.l.b16 %v216
  %v601 = vunpack.c.l.b16 %v217
  %v602 = vunpack.c.l.b16 %v218
  %v603 = vunpack.c.l.b16 %v219
  %v604 = vunpack.c.l.b16 %v220
  %v605 = vunpack.c.l.b16 %v221
  %v606 = vunpack.c.l.b16 %v222
  %v607 = vunpack.c.l.b16 %v223
  %v608 = vunpack.c.l.b16 %v224
  %v609 = vunpack.c.l.b16 %v225
  %v610 = vunpack.c.l.b16 %v226
  %v611 = vunpack.c.l.b16 %v227
  %v612 = vunpack.c.l.b16 %v228
  %v613 = vunpack.c.l.b16 %v229
  %v614 = vunpack.c.l.b16 %v230
  %v615 = vunpack.c.l.b16 %v231
  %v616 = vunpack.c.l.b16 %v232
  %v617 = vunpack.c.l.b16 %v233
  %v618 = vunpack.c.l.b16 %v234
  %v619 = vunpack.c.l.b16 %v235
  %v620 = vunpack.c.l.b16 %v236
  %v621 = vunpack.c.l.b16 %v237
  %v622 = vunpack.c.l.b16 %v238
  %v623 = vunpack.c.l.b16 %v239
  %v624 = vunpack.c.l.b16 %v240
  %v625 = vunpack.c.l.b16 %v241
  %v626 = vunpack.c.l.b16 %v242
  %v627 = vpack.c.b16 %v596, %v595
  %v628 = vpack.c.b16 %v598, %v597
  %v629 = vpack.c.b16 %v600, %v599
  %v630 = vpack.c.b16 %v602, %v601
  %v631 = vpack.c.b16 %v604, %v603
  %v632 = vpack.c.b16 %v606, %v605
  %v633 = vpack.c.b16 %v608, %v607
  %v634 = vpack.c.b16 %v610, %v609
  %v635 = vpack.c.b16 %v612, %v611
  %v636 = vpack.c.b16 %v614, %v613
  %v637 = vpack.c.b16 %v616, %v615
  %v638 = vpack.c.b16 %v618, %v617
  %v639 = vpack.c.b16 %v620, %v619
  %v640 = vpack.c.b16 %v622, %v621
  %v641 = vpack.c.b16 %v624, %v623
  %v642 = vpack.c.b16 %v626, %v625
  %659 = vmatprep.subr.bf16.mxu0 0
  %660 = vmatpush1.bf16.msra.mxu0 %v627
  %661 = vmatprep.subr.bf16.mxu0 0
  %662 = vmatpush1.bf16.msra.mxu0 %v628
  %663 = vmatprep.subr.bf16.mxu0 0
  %664 = vmatpush1.bf16.msra.mxu0 %v629
  %665 = vmatprep.subr.bf16.mxu0 0
  %666 = vmatpush1.bf16.msra.mxu0 %v630
  %667 = vmatprep.subr.bf16.mxu0 0
  %668 = vmatpush1.bf16.msra.mxu0 %v631
  %669 = vmatprep.subr.bf16.mxu0 0
  %670 = vmatpush1.bf16.msra.mxu0 %v632
  %671 = vmatprep.subr.bf16.mxu0 0
  %672 = vmatpush1.bf16.msra.mxu0 %v633
  %673 = vmatprep.subr.bf16.mxu0 0
  %674 = vmatpush1.bf16.msra.mxu0 %v634
  %675 = vmatprep.subr.bf16.mxu0 0
  %676 = vmatpush1.bf16.msra.mxu0 %v635
  %677 = vmatprep.subr.bf16.mxu0 0
  %678 = vmatpush1.bf16.msra.mxu0 %v636
  %679 = vmatprep.subr.bf16.mxu0 0
  %680 = vmatpush1.bf16.msra.mxu0 %v637
  %681 = vmatprep.subr.bf16.mxu0 0
  %682 = vmatpush1.bf16.msra.mxu0 %v638
  %683 = vmatprep.subr.bf16.mxu0 0
  %684 = vmatpush1.bf16.msra.mxu0 %v639
  %685 = vmatprep.subr.bf16.mxu0 0
  %686 = vmatpush1.bf16.msra.mxu0 %v640
  %687 = vmatprep.subr.bf16.mxu0 0
  %688 = vmatpush1.bf16.msra.mxu0 %v641
  %689 = vmatprep.subr.bf16.mxu0 0
  %690 = vmatpush1.bf16.msra.mxu0 %v642
  %691 = vmatprep.mubr.bf16.mxu0 %v436
  %692 = vmatmul.mubr.bf16.gmra.mrb[0].mxu0 %v435
  %v693 = vpop.f32.mrb[0].mxu0
  %v694 = vadd.f32 0.0, %v693
  %v695 = vpop.f32.mrb[0].mxu0
  %v696 = vpop.f32.mrb[0].mxu0
  %v697 = vadd.f32 0.0, %v696
  %v698 = vpop.f32.mrb[0].mxu0
  %699 = vmatprep.mubr.bf16.mxu0 %v438
  %700 = vmatmul.mubr.bf16.gmra.mrb[0].mxu0 %v437
  %v701 = vpop.f32.mrb[0].mxu0
  %v702 = vadd.f32 0.0, %v701
  %v703 = vpop.f32.mrb[0].mxu0
  %v704 = vpop.f32.mrb[0].mxu0
  %v705 = vadd.f32 0.0, %v704
  %v706 = vpop.f32.mrb[0].mxu0
  %707 = vmatprep.mubr.bf16.mxu0 %v440
  %708 = vmatmul.mubr.bf16.gmra.mrb[0].mxu0 %v439
  %v709 = vpop.f32.mrb[0].mxu0
  %v710 = vadd.f32 0.0, %v709
  %v711 = vpop.f32.mrb[0].mxu0
  %v712 = vpop.f32.mrb[0].mxu0
  %v713 = vadd.f32 0.0, %v712
  %v714 = vpop.f32.mrb[0].mxu0
  %715 = vmatprep.mubr.bf16.mxu0 %v442
  %716 = vmatmul.mubr.bf16.gmra.mrb[0].mxu0 %v441
  %v717 = vpop.f32.mrb[0].mxu0
  %v718 = vadd.f32 0.0, %v717
  %v719 = vpop.f32.mrb[0].mxu0
  %v720 = vpop.f32.mrb[0].mxu0
  %v721 = vadd.f32 0.0, %v720
  %v722 = vpop.f32.mrb[0].mxu0
  %723 = vmatprep.mubr.bf16.mxu0 %v444
  %724 = vmatmul.mubr.bf16.gmra.mrb[0].mxu0 %v443
  %v725 = vpop.f32.mrb[0].mxu0
  %v726 = vadd.f32 0.0, %v725
  %v727 = vpop.f32.mrb[0].mxu0
  %v728 = vpop.f32.mrb[0].mxu0
  %v729 = vadd.f32 0.0, %v728
  %v730 = vpop.f32.mrb[0].mxu0
  %731 = vmatprep.mubr.bf16.mxu0 %v446
  %732 = vmatmul.mubr.bf16.gmra.mrb[0].mxu0 %v445
  %v733 = vpop.f32.mrb[0].mxu0
  %v734 = vadd.f32 0.0, %v733
  %v735 = vpop.f32.mrb[0].mxu0
  %v736 = vpop.f32.mrb[0].mxu0
  %v737 = vadd.f32 0.0, %v736
  %v738 = vpop.f32.mrb[0].mxu0
  %739 = vmatprep.mubr.bf16.mxu0 %v448
  %740 = vmatmul.mubr.bf16.gmra.mrb[0].mxu0 %v447
  %v741 = vpop.f32.mrb[0].mxu0
  %v742 = vadd.f32 0.0, %v741
  %v743 = vpop.f32.mrb[0].mxu0
  %v744 = vpop.f32.mrb[0].mxu0
  %v745 = vadd.f32 0.0, %v744
  %v746 = vpop.f32.mrb[0].mxu0
  %747 = vmatprep.mubr.bf16.mxu0 %v450
  %748 = vmatmul.mubr.bf16.gmra.mrb[0].mxu0 %v449
  %v749 = vpop.f32.mrb[0].mxu0
  %v750 = vadd.f32 0.0, %v749
  %v751 = vpop.f32.mrb[0].mxu0
  %v752 = vpop.f32.mrb[0].mxu0
  %v753 = vadd.f32 0.0, %v752
  %v754 = vpop.f32.mrb[0].mxu0
  %755 = vmatprep.mubr.bf16.mxu0 %v452
  %756 = vmatmul.mubr.bf16.gmra.mrb[0].mxu0 %v451
  %v757 = vpop.f32.mrb[0].mxu0
  %v758 = vadd.f32 0.0, %v757
  %v759 = vpop.f32.mrb[0].mxu0
  %v760 = vpop.f32.mrb[0].mxu0
  %v761 = vadd.f32 0.0, %v760
  %v762 = vpop.f32.mrb[0].mxu0
  %763 = vmatprep.mubr.bf16.mxu0 %v454
  %764 = vmatmul.mubr.bf16.gmra.mrb[0].mxu0 %v453
  %v765 = vpop.f32.mrb[0].mxu0
  %v766 = vadd.f32 0.0, %v765
  %v767 = vpop.f32.mrb[0].mxu0
  %v768 = vpop.f32.mrb[0].mxu0
  %v769 = vadd.f32 0.0, %v768
  %v770 = vpop.f32.mrb[0].mxu0
  %771 = vmatprep.mubr.bf16.mxu0 %v456
  %772 = vmatmul.mubr.bf16.gmra.mrb[0].mxu0 %v455
  %v773 = vpop.f32.mrb[0].mxu0
  %v774 = vadd.f32 0.0, %v773
  %v775 = vpop.f32.mrb[0].mxu0
  %v776 = vpop.f32.mrb[0].mxu0
  %v777 = vadd.f32 0.0, %v776
  %v778 = vpop.f32.mrb[0].mxu0
  %779 = vmatprep.mubr.bf16.mxu0 %v458
  %780 = vmatmul.mubr.bf16.gmra.mrb[0].mxu0 %v457
  %v781 = vpop.f32.mrb[0].mxu0
  %v782 = vadd.f32 0.0, %v781
  %v783 = vpop.f32.mrb[0].mxu0
  %v784 = vpop.f32.mrb[0].mxu0
  %v785 = vadd.f32 0.0, %v784
  %v786 = vpop.f32.mrb[0].mxu0
  %787 = vmatprep.mubr.bf16.mxu0 %v460
  %788 = vmatmul.mubr.bf16.gmra.mrb[0].mxu0 %v459
  %v789 = vpop.f32.mrb[0].mxu0
  %v790 = vadd.f32 0.0, %v789
  %v791 = vpop.f32.mrb[0].mxu0
  %v792 = vpop.f32.mrb[0].mxu0
  %v793 = vadd.f32 0.0, %v792
  %v794 = vpop.f32.mrb[0].mxu0
  %795 = vmatprep.mubr.bf16.mxu0 %v462
  %796 = vmatmul.mubr.bf16.gmra.mrb[0].mxu0 %v461
  %v797 = vpop.f32.mrb[0].mxu0
  %v798 = vadd.f32 0.0, %v797
  %v799 = vpop.f32.mrb[0].mxu0
  %v800 = vpop.f32.mrb[0].mxu0
  %v801 = vadd.f32 0.0, %v800
  %v802 = vpop.f32.mrb[0].mxu0
  %803 = vmatprep.mubr.bf16.mxu0 %v464
  %804 = vmatmul.mubr.bf16.gmra.mrb[0].mxu0 %v463
  %v805 = vpop.f32.mrb[0].mxu0
  %v806 = vadd.f32 0.0, %v805
  %v807 = vpop.f32.mrb[0].mxu0
  %v808 = vpop.f32.mrb[0].mxu0
  %v809 = vadd.f32 0.0, %v808
  %v810 = vpop.f32.mrb[0].mxu0
  %811 = vmatprep.mubr.bf16.mxu0 %v466
  %812 = vmatmul.mubr.bf16.gmra.mrb[0].mxu0 %v465
  %v813 = vpop.f32.mrb[0].mxu0
  %v814 = vadd.f32 0.0, %v813
  %v815 = vpop.f32.mrb[0].mxu0
  %v816 = vpop.f32.mrb[0].mxu0
  %v817 = vadd.f32 0.0, %v816
  %v818 = vpop.f32.mrb[0].mxu0
  %819 = vmatprep.mubr.bf16.mxu0 %v468
  %820 = vmatmul.mubr.bf16.gmra.mrb[0].mxu0 %v467
  %v821 = vpop.f32.mrb[0].mxu0
  %v822 = vadd.f32 0.0, %v821
  %v823 = vpop.f32.mrb[0].mxu0
  %v824 = vpop.f32.mrb[0].mxu0
  %v825 = vadd.f32 0.0, %v824
  %v826 = vpop.f32.mrb[0].mxu0
  %827 = vmatprep.mubr.bf16.mxu0 %v470
  %828 = vmatmul.mubr.bf16.gmra.mrb[0].mxu0 %v469
  %v829 = vpop.f32.mrb[0].mxu0
  %v830 = vadd.f32 0.0, %v829
  %v831 = vpop.f32.mrb[0].mxu0
  %v832 = vpop.f32.mrb[0].mxu0
  %v833 = vadd.f32 0.0, %v832
  %v834 = vpop.f32.mrb[0].mxu0
  %835 = vmatprep.mubr.bf16.mxu0 %v472
  %836 = vmatmul.mubr.bf16.gmra.mrb[0].mxu0 %v471
  %v837 = vpop.f32.mrb[0].mxu0
  %v838 = vadd.f32 0.0, %v837
  %v839 = vpop.f32.mrb[0].mxu0
  %v840 = vpop.f32.mrb[0].mxu0
  %v841 = vadd.f32 0.0, %v840
  %v842 = vpop.f32.mrb[0].mxu0
  %843 = vmatprep.mubr.bf16.mxu0 %v474
  %844 = vmatmul.mubr.bf16.gmra.mrb[0].mxu0 %v473
  %v845 = vpop.f32.mrb[0].mxu0
  %v846 = vadd.f32 0.0, %v845
  %v847 = vpop.f32.mrb[0].mxu0
  %v848 = vpop.f32.mrb[0].mxu0
  %v849 = vadd.f32 0.0, %v848
  %v850 = vpop.f32.mrb[0].mxu0
  %851 = vmatprep.mubr.bf16.mxu0 %v476
  %852 = vmatmul.mubr.bf16.gmra.mrb[0].mxu0 %v475
  %v853 = vpop.f32.mrb[0].mxu0
  %v854 = vadd.f32 0.0, %v853
  %v855 = vpop.f32.mrb[0].mxu0
  %v856 = vpop.f32.mrb[0].mxu0
  %v857 = vadd.f32 0.0, %v856
  %v858 = vpop.f32.mrb[0].mxu0
  %859 = vmatprep.mubr.bf16.mxu0 %v478
  %860 = vmatmul.mubr.bf16.gmra.mrb[0].mxu0 %v477
  %v861 = vpop.f32.mrb[0].mxu0
  %v862 = vadd.f32 0.0, %v861
  %v863 = vpop.f32.mrb[0].mxu0
  %v864 = vpop.f32.mrb[0].mxu0
  %v865 = vadd.f32 0.0, %v864
  %v866 = vpop.f32.mrb[0].mxu0
  %867 = vmatprep.mubr.bf16.mxu0 %v480
  %868 = vmatmul.mubr.bf16.gmra.mrb[0].mxu0 %v479
  %v869 = vpop.f32.mrb[0].mxu0
  %v870 = vadd.f32 0.0, %v869
  %v871 = vpop.f32.mrb[0].mxu0
  %v872 = vpop.f32.mrb[0].mxu0
  %v873 = vadd.f32 0.0, %v872
  %v874 = vpop.f32.mrb[0].mxu0
  %875 = vmatprep.mubr.bf16.mxu0 %v482
  %876 = vmatmul.mubr.bf16.gmra.mrb[0].mxu0 %v481
  %v877 = vpop.f32.mrb[0].mxu0
  %v878 = vadd.f32 0.0, %v877
  %v879 = vpop.f32.mrb[0].mxu0
  %v880 = vpop.f32.mrb[0].mxu0
  %v881 = vadd.f32 0.0, %v880
  %v882 = vpop.f32.mrb[0].mxu0
  %883 = vmatprep.mubr.bf16.mxu0 %v484
  %884 = vmatmul.mubr.bf16.gmra.mrb[0].mxu0 %v483
  %v885 = vpop.f32.mrb[0].mxu0
  %v886 = vadd.f32 0.0, %v885
  %v887 = vpop.f32.mrb[0].mxu0
  %v888 = vpop.f32.mrb[0].mxu0
  %v889 = vadd.f32 0.0, %v888
  %v890 = vpop.f32.mrb[0].mxu0
  %891 = vmatprep.mubr.bf16.mxu0 %v486
  %892 = vmatmul.mubr.bf16.gmra.mrb[0].mxu0 %v485
  %v893 = vpop.f32.mrb[0].mxu0
  %v894 = vadd.f32 0.0, %v893
  %v895 = vpop.f32.mrb[0].mxu0
  %v896 = vpop.f32.mrb[0].mxu0
  %v897 = vadd.f32 0.0, %v896
  %v898 = vpop.f32.mrb[0].mxu0
  %899 = vmatprep.mubr.bf16.mxu0 %v488
  %900 = vmatmul.mubr.bf16.gmra.mrb[0].mxu0 %v487
  %v901 = vpop.f32.mrb[0].mxu0
  %v902 = vadd.f32 0.0, %v901
  %v903 = vpop.f32.mrb[0].mxu0
  %v904 = vpop.f32.mrb[0].mxu0
  %v905 = vadd.f32 0.0, %v904
  %v906 = vpop.f32.mrb[0].mxu0
  %907 = vmatprep.mubr.bf16.mxu0 %v490
  %908 = vmatmul.mubr.bf16.gmra.mrb[0].mxu0 %v489
  %v909 = vpop.f32.mrb[0].mxu0
  %v910 = vadd.f32 0.0, %v909
  %v911 = vpop.f32.mrb[0].mxu0
  %v912 = vpop.f32.mrb[0].mxu0
  %v913 = vadd.f32 0.0, %v912
  %v914 = vpop.f32.mrb[0].mxu0
  %915 = vmatprep.mubr.bf16.mxu0 %v492
  %916 = vmatmul.mubr.bf16.gmra.mrb[0].mxu0 %v491
  %v917 = vpop.f32.mrb[0].mxu0
  %v918 = vadd.f32 0.0, %v917
  %v919 = vpop.f32.mrb[0].mxu0
  %v920 = vpop.f32.mrb[0].mxu0
  %v921 = vadd.f32 0.0, %v920
  %v922 = vpop.f32.mrb[0].mxu0
  %923 = vmatprep.mubr.bf16.mxu0 %v494
  %924 = vmatmul.mubr.bf16.gmra.mrb[0].mxu0 %v493
  %v925 = vpop.f32.mrb[0].mxu0
  %v926 = vadd.f32 0.0, %v925
  %v927 = vpop.f32.mrb[0].mxu0
  %v928 = vpop.f32.mrb[0].mxu0
  %v929 = vadd.f32 0.0, %v928
  %v930 = vpop.f32.mrb[0].mxu0
  %931 = vmatprep.mubr.bf16.mxu0 %v496
  %932 = vmatmul.mubr.bf16.gmra.mrb[0].mxu0 %v495
  %v933 = vpop.f32.mrb[0].mxu0
  %v934 = vadd.f32 0.0, %v933
  %v935 = vpop.f32.mrb[0].mxu0
  %v936 = vpop.f32.mrb[0].mxu0
  %v937 = vadd.f32 0.0, %v936
  %v938 = vpop.f32.mrb[0].mxu0
  %939 = vmatprep.mubr.bf16.mxu0 %v498
  %940 = vmatmul.mubr.bf16.gmra.mrb[0].mxu0 %v497
  %v941 = vpop.f32.mrb[0].mxu0
  %v942 = vadd.f32 0.0, %v941
  %v943 = vpop.f32.mrb[0].mxu0
  %v944 = vpop.f32.mrb[0].mxu0
  %v945 = vadd.f32 0.0, %v944
  %v946 = vpop.f32.mrb[0].mxu0
  %947 = vdwg.mxu0
  %v948 = vadd.f32 %v83, %v694
  %v949 = vadd.f32 %v84, %v697
  %v950 = vadd.f32 %v85, %v702
  %v951 = vadd.f32 %v86, %v705
  %v952 = vadd.f32 %v87, %v710
  %v953 = vadd.f32 %v88, %v713
  %v954 = vadd.f32 %v89, %v718
  %v955 = vadd.f32 %v90, %v721
  %v956 = vadd.f32 %v91, %v726
  %v957 = vadd.f32 %v92, %v729
  %v958 = vadd.f32 %v93, %v734
  %v959 = vadd.f32 %v94, %v737
  %v960 = vadd.f32 %v95, %v742
  %v961 = vadd.f32 %v96, %v745
  %v962 = vadd.f32 %v97, %v750
  %v963 = vadd.f32 %v98, %v753
  %v964 = vadd.f32 %v99, %v758
  %v965 = vadd.f32 %v100, %v761
  %v966 = vadd.f32 %v101, %v766
  %v967 = vadd.f32 %v102, %v769
  %v968 = vadd.f32 %v103, %v774
  %v969 = vadd.f32 %v104, %v777
  %v970 = vadd.f32 %v105, %v782
  %v971 = vadd.f32 %v106, %v785
  %v972 = vadd.f32 %v107, %v790
  %v973 = vadd.f32 %v108, %v793
  %v974 = vadd.f32 %v109, %v798
  %v975 = vadd.f32 %v110, %v801
  %v976 = vadd.f32 %v111, %v806
  %v977 = vadd.f32 %v112, %v809
  %v978 = vadd.f32 %v113, %v814
  %v979 = vadd.f32 %v114, %v817
  %v980 = vadd.f32 %v115, %v822
  %v981 = vadd.f32 %v116, %v825
  %v982 = vadd.f32 %v117, %v830
  %v983 = vadd.f32 %v118, %v833
  %v984 = vadd.f32 %v119, %v838
  %v985 = vadd.f32 %v120, %v841
  %v986 = vadd.f32 %v121, %v846
  %v987 = vadd.f32 %v122, %v849
  %v988 = vadd.f32 %v123, %v854
  %v989 = vadd.f32 %v124, %v857
  %v990 = vadd.f32 %v125, %v862
  %v991 = vadd.f32 %v126, %v865
  %v992 = vadd.f32 %v127, %v870
  %v993 = vadd.f32 %v128, %v873
  %v994 = vadd.f32 %v129, %v878
  %v995 = vadd.f32 %v130, %v881
  %v996 = vadd.f32 %v131, %v886
  %v997 = vadd.f32 %v132, %v889
  %v998 = vadd.f32 %v133, %v894
  %v999 = vadd.f32 %v134, %v897
  %v1000 = vadd.f32 %v135, %v902
  %v1001 = vadd.f32 %v136, %v905
  %v1002 = vadd.f32 %v137, %v910
  %v1003 = vadd.f32 %v138, %v913
  %v1004 = vadd.f32 %v139, %v918
  %v1005 = vadd.f32 %v140, %v921
  %v1006 = vadd.f32 %v141, %v926
  %v1007 = vadd.f32 %v142, %v929
  %v1008 = vadd.f32 %v143, %v934
  %v1009 = vadd.f32 %v144, %v937
  %v1010 = vadd.f32 %v145, %v942
  %v1011 = vadd.f32 %v146, %v945
  %1012 = vst [vmem:[#allocation2] sm:$0xff] %v948
  %1013 = vst [vmem:[#allocation2 + $0x8] sm:$0xff] %v949
  %1014 = vst [vmem:[#allocation2 + $0x10] sm:$0xff] %v950
  %1015 = vst [vmem:[#allocation2 + $0x18] sm:$0xff] %v951
  %1016 = vst [vmem:[#allocation2 + $0x20] sm:$0xff] %v952
  %1017 = vst [vmem:[#allocation2 + $0x28] sm:$0xff] %v953
  %1018 = vst [vmem:[#allocation2 + $0x30] sm:$0xff] %v954
  %1019 = vst [vmem:[#allocation2 + $0x38] sm:$0xff] %v955
  %1020 = vst [vmem:[#allocation2 + $0x40] sm:$0xff] %v956
  %1021 = vst [vmem:[#allocation2 + $0x48] sm:$0xff] %v957
  %1022 = vst [vmem:[#allocation2 + $0x50] sm:$0xff] %v958
  %1023 = vst [vmem:[#allocation2 + $0x58] sm:$0xff] %v959
  %1024 = vst [vmem:[#allocation2 + $0x60] sm:$0xff] %v960
  %1025 = vst [vmem:[#allocation2 + $0x68] sm:$0xff] %v961
  %1026 = vst [vmem:[#allocation2 + $0x70] sm:$0xff] %v962
  %1027 = vst [vmem:[#allocation2 + $0x78] sm:$0xff] %v963
  %1028 = vst [vmem:[#allocation2 + $0x80] sm:$0xff] %v964
  %1029 = vst [vmem:[#allocation2 + $0x88] sm:$0xff] %v965
  %1030 = vst [vmem:[#allocation2 + $0x90] sm:$0xff] %v966
  %1031 = vst [vmem:[#allocation2 + $0x98] sm:$0xff] %v967
  %1032 = vst [vmem:[#allocation2 + $0xa0] sm:$0xff] %v968
  %1033 = vst [vmem:[#allocation2 + $0xa8] sm:$0xff] %v969
  %1034 = vst [vmem:[#allocation2 + $0xb0] sm:$0xff] %v970
  %1035 = vst [vmem:[#allocation2 + $0xb8] sm:$0xff] %v971
  %1036 = vst [vmem:[#allocation2 + $0xc0] sm:$0xff] %v972
  %1037 = vst [vmem:[#allocation2 + $0xc8] sm:$0xff] %v973
  %1038 = vst [vmem:[#allocation2 + $0xd0] sm:$0xff] %v974
  %1039 = vst [vmem:[#allocation2 + $0xd8] sm:$0xff] %v975
  %1040 = vst [vmem:[#allocation2 + $0xe0] sm:$0xff] %v976
  %1041 = vst [vmem:[#allocation2 + $0xe8] sm:$0xff] %v977
  %1042 = vst [vmem:[#allocation2 + $0xf0] sm:$0xff] %v978
  %1043 = vst [vmem:[#allocation2 + $0xf8] sm:$0xff] %v979
  %1044 = vst [vmem:[#allocation2 + $0x100] sm:$0xff] %v980
  %1045 = vst [vmem:[#allocation2 + $0x108] sm:$0xff] %v981
  %1046 = vst [vmem:[#allocation2 + $0x110] sm:$0xff] %v982
  %1047 = vst [vmem:[#allocation2 + $0x118] sm:$0xff] %v983
  %1048 = vst [vmem:[#allocation2 + $0x120] sm:$0xff] %v984
  %1049 = vst [vmem:[#allocation2 + $0x128] sm:$0xff] %v985
  %1050 = vst [vmem:[#allocation2 + $0x130] sm:$0xff] %v986
  %1051 = vst [vmem:[#allocation2 + $0x138] sm:$0xff] %v987
  %1052 = vst [vmem:[#allocation2 + $0x140] sm:$0xff] %v988
  %1053 = vst [vmem:[#allocation2 + $0x148] sm:$0xff] %v989
  %1054 = vst [vmem:[#allocation2 + $0x150] sm:$0xff] %v990
  %1055 = vst [vmem:[#allocation2 + $0x158] sm:$0xff] %v991
  %1056 = vst [vmem:[#allocation2 + $0x160] sm:$0xff] %v992
  %1057 = vst [vmem:[#allocation2 + $0x168] sm:$0xff] %v993
  %1058 = vst [vmem:[#allocation2 + $0x170] sm:$0xff] %v994
  %1059 = vst [vmem:[#allocation2 + $0x178] sm:$0xff] %v995
  %1060 = vst [vmem:[#allocation2 + $0x180] sm:$0xff] %v996
  %1061 = vst [vmem:[#allocation2 + $0x188] sm:$0xff] %v997
  %1062 = vst [vmem:[#allocation2 + $0x190] sm:$0xff] %v998
  %1063 = vst [vmem:[#allocation2 + $0x198] sm:$0xff] %v999
  %1064 = vst [vmem:[#allocation2 + $0x1a0] sm:$0xff] %v1000
  %1065 = vst [vmem:[#allocation2 + $0x1a8] sm:$0xff] %v1001
  %1066 = vst [vmem:[#allocation2 + $0x1b0] sm:$0xff] %v1002
  %1067 = vst [vmem:[#allocation2 + $0x1b8] sm:$0xff] %v1003
  %1068 = vst [vmem:[#allocation2 + $0x1c0] sm:$0xff] %v1004
  %1069 = vst [vmem:[#allocation2 + $0x1c8] sm:$0xff] %v1005
  %1070 = vst [vmem:[#allocation2 + $0x1d0] sm:$0xff] %v1006
  %1071 = vst [vmem:[#allocation2 + $0x1d8] sm:$0xff] %v1007
  %1072 = vst [vmem:[#allocation2 + $0x1e0] sm:$0xff] %v1008
  %1073 = vst [vmem:[#allocation2 + $0x1e8] sm:$0xff] %v1009
  %1074 = vst [vmem:[#allocation2 + $0x1f0] sm:$0xff] %v1010
  %1075 = vst [vmem:[#allocation2 + $0x1f8] sm:$0xff] %v1011
  // Predicated region
  $region18: #{matmul_bias_act.1} parent=0 // pred_check
    %p1076 = pneg %p15
  $region19: #{matmul_bias_act.1} parent=0 // pred_check_branch
    %1078 = sbr.rel (%p1076) target = $region21
  $region20: #{matmul_bias_act.1} parent=0 // pred_region
    %v1079 = vld [vmem:[#allocation2] sm:$0xff]
    %v1080 = vld [vmem:[#allocation2 + $0x8] sm:$0xff]
    %v1081 = vld [vmem:[#allocation2 + $0x10] sm:$0xff]
    %v1082 = vld [vmem:[#allocation2 + $0x18] sm:$0xff]
    %v1083 = vld [vmem:[#allocation2 + $0x20] sm:$0xff]
    %v1084 = vld [vmem:[#allocation2 + $0x28] sm:$0xff]
    %v1085 = vld [vmem:[#allocation2 + $0x30] sm:$0xff]
    %v1086 = vld [vmem:[#allocation2 + $0x38] sm:$0xff]
    %v1087 = vld [vmem:[#allocation2 + $0x40] sm:$0xff]
    %v1088 = vld [vmem:[#allocation2 + $0x48] sm:$0xff]
    %v1089 = vld [vmem:[#allocation2 + $0x50] sm:$0xff]
    %v1090 = vld [vmem:[#allocation2 + $0x58] sm:$0xff]
    %v1091 = vld [vmem:[#allocation2 + $0x60] sm:$0xff]
    %v1092 = vld [vmem:[#allocation2 + $0x68] sm:$0xff]
    %v1093 = vld [vmem:[#allocation2 + $0x70] sm:$0xff]
    %v1094 = vld [vmem:[#allocation2 + $0x78] sm:$0xff]
    %v1095 = vld [vmem:[#allocation2 + $0x80] sm:$0xff]
    %v1096 = vld [vmem:[#allocation2 + $0x88] sm:$0xff]
    %v1097 = vld [vmem:[#allocation2 + $0x90] sm:$0xff]
    %v1098 = vld [vmem:[#allocation2 + $0x98] sm:$0xff]
    %v1099 = vld [vmem:[#allocation2 + $0xa0] sm:$0xff]
    %v1100 = vld [vmem:[#allocation2 + $0xa8] sm:$0xff]
    %v1101 = vld [vmem:[#allocation2 + $0xb0] sm:$0xff]
    %v1102 = vld [vmem:[#allocation2 + $0xb8] sm:$0xff]
    %v1103 = vld [vmem:[#allocation2 + $0xc0] sm:$0xff]
    %v1104 = vld [vmem:[#allocation2 + $0xc8] sm:$0xff]
    %v1105 = vld [vmem:[#allocation2 + $0xd0] sm:$0xff]
    %v1106 = vld [vmem:[#allocation2 + $0xd8] sm:$0xff]
    %v1107 = vld [vmem:[#allocation2 + $0xe0] sm:$0xff]
    %v1108 = vld [vmem:[#allocation2 + $0xe8] sm:$0xff]
    %v1109 = vld [vmem:[#allocation2 + $0xf0] sm:$0xff]
    %v1110 = vld [vmem:[#allocation2 + $0xf8] sm:$0xff]
    %v1111 = vld [vmem:[#allocation2 + $0x100] sm:$0xff]
    %v1112 = vld [vmem:[#allocation2 + $0x108] sm:$0xff]
    %v1113 = vld [vmem:[#allocation2 + $0x110] sm:$0xff]
    %v1114 = vld [vmem:[#allocation2 + $0x118] sm:$0xff]
    %v1115 = vld [vmem:[#allocation2 + $0x120] sm:$0xff]
    %v1116 = vld [vmem:[#allocation2 + $0x128] sm:$0xff]
    %v1117 = vld [vmem:[#allocation2 + $0x130] sm:$0xff]
    %v1118 = vld [vmem:[#allocation2 + $0x138] sm:$0xff]
    %v1119 = vld [vmem:[#allocation2 + $0x140] sm:$0xff]
    %v1120 = vld [vmem:[#allocation2 + $0x148] sm:$0xff]
    %v1121 = vld [vmem:[#allocation2 + $0x150] sm:$0xff]
    %v1122 = vld [vmem:[#allocation2 + $0x158] sm:$0xff]
    %v1123 = vld [vmem:[#allocation2 + $0x160] sm:$0xff]
    %v1124 = vld [vmem:[#allocation2 + $0x168] sm:$0xff]
    %v1125 = vld [vmem:[#allocation2 + $0x170] sm:$0xff]
    %v1126 = vld [vmem:[#allocation2 + $0x178] sm:$0xff]
    %v1127 = vld [vmem:[#allocation2 + $0x180] sm:$0xff]
    %v1128 = vld [vmem:[#allocation2 + $0x188] sm:$0xff]
    %v1129 = vld [vmem:[#allocation2 + $0x190] sm:$0xff]
    %v1130 = vld [vmem:[#allocation2 + $0x198] sm:$0xff]
    %v1131 = vld [vmem:[#allocation2 + $0x1a0] sm:$0xff]
    %v1132 = vld [vmem:[#allocation2 + $0x1a8] sm:$0xff]
    %v1133 = vld [vmem:[#allocation2 + $0x1b0] sm:$0xff]
    %v1134 = vld [vmem:[#allocation2 + $0x1b8] sm:$0xff]
    %v1135 = vld [vmem:[#allocation2 + $0x1c0] sm:$0xff]
    %v1136 = vld [vmem:[#allocation2 + $0x1c8] sm:$0xff]
    %v1137 = vld [vmem:[#allocation2 + $0x1d0] sm:$0xff]
    %v1138 = vld [vmem:[#allocation2 + $0x1d8] sm:$0xff]
    %v1139 = vld [vmem:[#allocation2 + $0x1e0] sm:$0xff]
    %v1140 = vld [vmem:[#allocation2 + $0x1e8] sm:$0xff]
    %v1141 = vld [vmem:[#allocation2 + $0x1f0] sm:$0xff]
    %v1142 = vld [vmem:[#allocation2 + $0x1f8] sm:$0xff]
    %v1143 = vld [vmem:[%s2] sm:$0x1]
    %v1145 = vlaneseq
    %v1146 = vshrl.u32 %v1145, 7
    %v1147 = vsub.s32 0, %v1146
    %v1148 = vrot.slane %v1143, %v1147
    %v1150 = vadd.f32 %v1079, %v1148
    %v1151 = vadd.f32 %v1080, %v1148
    %v1152 = vadd.f32 %v1081, %v1148
    %v1153 = vadd.f32 %v1082, %v1148
    %v1154 = vadd.f32 %v1083, %v1148
    %v1155 = vadd.f32 %v1084, %v1148
    %v1156 = vadd.f32 %v1085, %v1148
    %v1157 = vadd.f32 %v1086, %v1148
    %v1158 = vadd.f32 %v1087, %v1148
    %v1159 = vadd.f32 %v1088, %v1148
    %v1160 = vadd.f32 %v1089, %v1148
    %v1161 = vadd.f32 %v1090, %v1148
    %v1162 = vadd.f32 %v1091, %v1148
    %v1163 = vadd.f32 %v1092, %v1148
    %v1164 = vadd.f32 %v1093, %v1148
    %v1165 = vadd.f32 %v1094, %v1148
    %v1166 = vadd.f32 %v1095, %v1148
    %v1167 = vadd.f32 %v1096, %v1148
    %v1168 = vadd.f32 %v1097, %v1148
    %v1169 = vadd.f32 %v1098, %v1148
    %v1170 = vadd.f32 %v1099, %v1148
    %v1171 = vadd.f32 %v1100, %v1148
    %v1172 = vadd.f32 %v1101, %v1148
    %v1173 = vadd.f32 %v1102, %v1148
    %v1174 = vadd.f32 %v1103, %v1148
    %v1175 = vadd.f32 %v1104, %v1148
    %v1176 = vadd.f32 %v1105, %v1148
    %v1177 = vadd.f32 %v1106, %v1148
    %v1178 = vadd.f32 %v1107, %v1148
    %v1179 = vadd.f32 %v1108, %v1148
    %v1180 = vadd.f32 %v1109, %v1148
    %v1181 = vadd.f32 %v1110, %v1148
    %v1182 = vadd.f32 %v1111, %v1148
    %v1183 = vadd.f32 %v1112, %v1148
    %v1184 = vadd.f32 %v1113, %v1148
    %v1185 = vadd.f32 %v1114, %v1148
    %v1186 = vadd.f32 %v1115, %v1148
    %v1187 = vadd.f32 %v1116, %v1148
    %v1188 = vadd.f32 %v1117, %v1148
    %v1189 = vadd.f32 %v1118, %v1148
    %v1190 = vadd.f32 %v1119, %v1148
    %v1191 = vadd.f32 %v1120, %v1148
    %v1192 = vadd.f32 %v1121, %v1148
    %v1193 = vadd.f32 %v1122, %v1148
    %v1194 = vadd.f32 %v1123, %v1148
    %v1195 = vadd.f32 %v1124, %v1148
    %v1196 = vadd.f32 %v1125, %v1148
    %v1197 = vadd.f32 %v1126, %v1148
    %v1198 = vadd.f32 %v1127, %v1148
    %v1199 = vadd.f32 %v1128, %v1148
    %v1200 = vadd.f32 %v1129, %v1148
    %v1201 = vadd.f32 %v1130, %v1148
    %v1202 = vadd.f32 %v1131, %v1148
    %v1203 = vadd.f32 %v1132, %v1148
    %v1204 = vadd.f32 %v1133, %v1148
    %v1205 = vadd.f32 %v1134, %v1148
    %v1206 = vadd.f32 %v1135, %v1148
    %v1207 = vadd.f32 %v1136, %v1148
    %v1208 = vadd.f32 %v1137, %v1148
    %v1209 = vadd.f32 %v1138, %v1148
    %v1210 = vadd.f32 %v1139, %v1148
    %v1211 = vadd.f32 %v1140, %v1148
    %v1212 = vadd.f32 %v1141, %v1148
    %v1213 = vadd.f32 %v1142, %v1148
    %v1214 = vmax.f32 %v1150, 0.0
    %v1215 = vmax.f32 %v1151, 0.0
    %v1216 = vmax.f32 %v1152, 0.0
    %v1217 = vmax.f32 %v1153, 0.0
    %v1218 = vmax.f32 %v1154, 0.0
    %v1219 = vmax.f32 %v1155, 0.0
    %v1220 = vmax.f32 %v1156, 0.0
    %v1221 = vmax.f32 %v1157, 0.0
    %v1222 = vmax.f32 %v1158, 0.0
    %v1223 = vmax.f32 %v1159, 0.0
    %v1224 = vmax.f32 %v1160, 0.0
    %v1225 = vmax.f32 %v1161, 0.0
    %v1226 = vmax.f32 %v1162, 0.0
    %v1227 = vmax.f32 %v1163, 0.0
    %v1228 = vmax.f32 %v1164, 0.0
    %v1229 = vmax.f32 %v1165, 0.0
    %v1230 = vmax.f32 %v1166, 0.0
    %v1231 = vmax.f32 %v1167, 0.0
    %v1232 = vmax.f32 %v1168, 0.0
    %v1233 = vmax.f32 %v1169, 0.0
    %v1234 = vmax.f32 %v1170, 0.0
    %v1235 = vmax.f32 %v1171, 0.0
    %v1236 = vmax.f32 %v1172, 0.0
    %v1237 = vmax.f32 %v1173, 0.0
    %v1238 = vmax.f32 %v1174, 0.0
    %v1239 = vmax.f32 %v1175, 0.0
    %v1240 = vmax.f32 %v1176, 0.0
    %v1241 = vmax.f32 %v1177, 0.0
    %v1242 = vmax.f32 %v1178, 0.0
    %v1243 = vmax.f32 %v1179, 0.0
    %v1244 = vmax.f32 %v1180, 0.0
    %v1245 = vmax.f32 %v1181, 0.0
    %v1246 = vmax.f32 %v1182, 0.0
    %v1247 = vmax.f32 %v1183, 0.0
    %v1248 = vmax.f32 %v1184, 0.0
    %v1249 = vmax.f32 %v1185, 0.0
    %v1250 = vmax.f32 %v1186, 0.0
    %v1251 = vmax.f32 %v1187, 0.0
    %v1252 = vmax.f32 %v1188, 0.0
    %v1253 = vmax.f32 %v1189, 0.0
    %v1254 = vmax.f32 %v1190, 0.0
    %v1255 = vmax.f32 %v1191, 0.0
    %v1256 = vmax.f32 %v1192, 0.0
    %v1257 = vmax.f32 %v1193, 0.0
    %v1258 = vmax.f32 %v1194, 0.0
    %v1259 = vmax.f32 %v1195, 0.0
    %v1260 = vmax.f32 %v1196, 0.0
    %v1261 = vmax.f32 %v1197, 0.0
    %v1262 = vmax.f32 %v1198, 0.0
    %v1263 = vmax.f32 %v1199, 0.0
    %v1264 = vmax.f32 %v1200, 0.0
    %v1265 = vmax.f32 %v1201, 0.0
    %v1266 = vmax.f32 %v1202, 0.0
    %v1267 = vmax.f32 %v1203, 0.0
    %v1268 = vmax.f32 %v1204, 0.0
    %v1269 = vmax.f32 %v1205, 0.0
    %v1270 = vmax.f32 %v1206, 0.0
    %v1271 = vmax.f32 %v1207, 0.0
    %v1272 = vmax.f32 %v1208, 0.0
    %v1273 = vmax.f32 %v1209, 0.0
    %v1274 = vmax.f32 %v1210, 0.0
    %v1275 = vmax.f32 %v1211, 0.0
    %v1276 = vmax.f32 %v1212, 0.0
    %v1277 = vmax.f32 %v1213, 0.0
    %v1278 = vpack.c.bf16 %v1215, %v1214
    %v1279 = vpack.c.bf16 %v1217, %v1216
    %v1280 = vpack.c.bf16 %v1219, %v1218
    %v1281 = vpack.c.bf16 %v1221, %v1220
    %v1282 = vpack.c.bf16 %v1223, %v1222
    %v1283 = vpack.c.bf16 %v1225, %v1224
    %v1284 = vpack.c.bf16 %v1227, %v1226
    %v1285 = vpack.c.bf16 %v1229, %v1228
    %v1286 = vpack.c.bf16 %v1231, %v1230
    %v1287 = vpack.c.bf16 %v1233, %v1232
    %v1288 = vpack.c.bf16 %v1235, %v1234
    %v1289 = vpack.c.bf16 %v1237, %v1236
    %v1290 = vpack.c.bf16 %v1239, %v1238
    %v1291 = vpack.c.bf16 %v1241, %v1240
    %v1292 = vpack.c.bf16 %v1243, %v1242
    %v1293 = vpack.c.bf16 %v1245, %v1244
    %v1294 = vpack.c.bf16 %v1247, %v1246
    %v1295 = vpack.c.bf16 %v1249, %v1248
    %v1296 = vpack.c.bf16 %v1251, %v1250
    %v1297 = vpack.c.bf16 %v1253, %v1252
    %v1298 = vpack.c.bf16 %v1255, %v1254
    %v1299 = vpack.c.bf16 %v1257, %v1256
    %v1300 = vpack.c.bf16 %v1259, %v1258
    %v1301 = vpack.c.bf16 %v1261, %v1260
    %v1302 = vpack.c.bf16 %v1263, %v1262
    %v1303 = vpack.c.bf16 %v1265, %v1264
    %v1304 = vpack.c.bf16 %v1267, %v1266
    %v1305 = vpack.c.bf16 %v1269, %v1268
    %v1306 = vpack.c.bf16 %v1271, %v1270
    %v1307 = vpack.c.bf16 %v1273, %v1272
    %v1308 = vpack.c.bf16 %v1275, %v1274
    %v1309 = vpack.c.bf16 %v1277, %v1276
    %v1342 = vunpack.c.l.b16 %v1278
    %v1343 = vunpack.c.h.b16 %v1278
    %v1344 = vunpack.c.l.b16 %v1279
    %v1345 = vunpack.c.h.b16 %v1279
    %v1346 = vunpack.c.l.b16 %v1280
    %v1347 = vunpack.c.h.b16 %v1280
    %v1348 = vunpack.c.l.b16 %v1281
    %v1349 = vunpack.c.h.b16 %v1281
    %v1350 = vunpack.c.l.b16 %v1282
    %v1351 = vunpack.c.h.b16 %v1282
    %v1352 = vunpack.c.l.b16 %v1283
    %v1353 = vunpack.c.h.b16 %v1283
    %v1354 = vunpack.c.l.b16 %v1284
    %v1355 = vunpack.c.h.b16 %v1284
    %v1356 = vunpack.c.l.b16 %v1285
    %v1357 = vunpack.c.h.b16 %v1285
    %v1358 = vunpack.c.l.b16 %v1286
    %v1359 = vunpack.c.h.b16 %v1286
    %v1360 = vunpack.c.l.b16 %v1287
    %v1361 = vunpack.c.h.b16 %v1287
    %v1362 = vunpack.c.l.b16 %v1288
    %v1363 = vunpack.c.h.b16 %v1288
    %v1364 = vunpack.c.l.b16 %v1289
    %v1365 = vunpack.c.h.b16 %v1289
    %v1366 = vunpack.c.l.b16 %v1290
    %v1367 = vunpack.c.h.b16 %v1290
    %v1368 = vunpack.c.l.b16 %v1291
    %v1369 = vunpack.c.h.b16 %v1291
    %v1370 = vunpack.c.l.b16 %v1292
    %v1371 = vunpack.c.h.b16 %v1292
    %v1372 = vunpack.c.l.b16 %v1293
    %v1373 = vunpack.c.h.b16 %v1293
    %v1374 = vunpack.c.l.b16 %v1294
    %v1375 = vunpack.c.h.b16 %v1294
    %v1376 = vunpack.c.l.b16 %v1295
    %v1377 = vunpack.c.h.b16 %v1295
    %v1378 = vunpack.c.l.b16 %v1296
    %v1379 = vunpack.c.h.b16 %v1296
    %v1380 = vunpack.c.l.b16 %v1297
    %v1381 = vunpack.c.h.b16 %v1297
    %v1382 = vunpack.c.l.b16 %v1298
    %v1383 = vunpack.c.h.b16 %v1298
    %v1384 = vunpack.c.l.b16 %v1299
    %v1385 = vunpack.c.h.b16 %v1299
    %v1386 = vunpack.c.l.b16 %v1300
    %v1387 = vunpack.c.h.b16 %v1300
    %v1388 = vunpack.c.l.b16 %v1301
    %v1389 = vunpack.c.h.b16 %v1301
    %v1390 = vunpack.c.l.b16 %v1302
    %v1391 = vunpack.c.h.b16 %v1302
    %v1392 = vunpack.c.l.b16 %v1303
    %v1393 = vunpack.c.h.b16 %v1303
    %v1394 = vunpack.c.l.b16 %v1304
    %v1395 = vunpack.c.h.b16 %v1304
    %v1396 = vunpack.c.l.b16 %v1305
    %v1397 = vunpack.c.h.b16 %v1305
    %v1398 = vunpack.c.l.b16 %v1306
    %v1399 = vunpack.c.h.b16 %v1306
    %v1400 = vunpack.c.l.b16 %v1307
    %v1401 = vunpack.c.h.b16 %v1307
    %v1402 = vunpack.c.l.b16 %v1308
    %v1403 = vunpack.c.h.b16 %v1308
    %v1404 = vunpack.c.l.b16 %v1309
    %v1405 = vunpack.c.h.b16 %v1309
    %v1406 = vpack.c.b16 %v1342, %v1342
    %v1407 = vpack.c.b16 %v1343, %v1343
    %v1408 = vpack.c.b16 %v1344, %v1344
    %v1409 = vpack.c.b16 %v1345, %v1345
    %v1410 = vpack.c.b16 %v1346, %v1346
    %v1411 = vpack.c.b16 %v1347, %v1347
    %v1412 = vpack.c.b16 %v1348, %v1348
    %v1413 = vpack.c.b16 %v1349, %v1349
    %v1414 = vpack.c.b16 %v1350, %v1350
    %v1415 = vpack.c.b16 %v1351, %v1351
    %v1416 = vpack.c.b16 %v1352, %v1352
    %v1417 = vpack.c.b16 %v1353, %v1353
    %v1418 = vpack.c.b16 %v1354, %v1354
    %v1419 = vpack.c.b16 %v1355, %v1355
    %v1420 = vpack.c.b16 %v1356, %v1356
    %v1421 = vpack.c.b16 %v1357, %v1357
    %v1422 = vpack.c.b16 %v1358, %v1358
    %v1423 = vpack.c.b16 %v1359, %v1359
    %v1424 = vpack.c.b16 %v1360, %v1360
    %v1425 = vpack.c.b16 %v1361, %v1361
    %v1426 = vpack.c.b16 %v1362, %v1362
    %v1427 = vpack.c.b16 %v1363, %v1363
    %v1428 = vpack.c.b16 %v1364, %v1364
    %v1429 = vpack.c.b16 %v1365, %v1365
    %v1430 = vpack.c.b16 %v1366, %v1366
    %v1431 = vpack.c.b16 %v1367, %v1367
    %v1432 = vpack.c.b16 %v1368, %v1368
    %v1433 = vpack.c.b16 %v1369, %v1369
    %v1434 = vpack.c.b16 %v1370, %v1370
    %v1435 = vpack.c.b16 %v1371, %v1371
    %v1436 = vpack.c.b16 %v1372, %v1372
    %v1437 = vpack.c.b16 %v1373, %v1373
    %v1438 = vpack.c.b16 %v1374, %v1374
    %v1439 = vpack.c.b16 %v1375, %v1375
    %v1440 = vpack.c.b16 %v1376, %v1376
    %v1441 = vpack.c.b16 %v1377, %v1377
    %v1442 = vpack.c.b16 %v1378, %v1378
    %v1443 = vpack.c.b16 %v1379, %v1379
    %v1444 = vpack.c.b16 %v1380, %v1380
    %v1445 = vpack.c.b16 %v1381, %v1381
    %v1446 = vpack.c.b16 %v1382, %v1382
    %v1447 = vpack.c.b16 %v1383, %v1383
    %v1448 = vpack.c.b16 %v1384, %v1384
    %v1449 = vpack.c.b16 %v1385, %v1385
    %v1450 = vpack.c.b16 %v1386, %v1386
    %v1451 = vpack.c.b16 %v1387, %v1387
    %v1452 = vpack.c.b16 %v1388, %v1388
    %v1453 = vpack.c.b16 %v1389, %v1389
    %v1454 = vpack.c.b16 %v1390, %v1390
    %v1455 = vpack.c.b16 %v1391, %v1391
    %v1456 = vpack.c.b16 %v1392, %v1392
    %v1457 = vpack.c.b16 %v1393, %v1393
    %v1458 = vpack.c.b16 %v1394, %v1394
    %v1459 = vpack.c.b16 %v1395, %v1395
    %v1460 = vpack.c.b16 %v1396, %v1396
    %v1461 = vpack.c.b16 %v1397, %v1397
    %v1462 = vpack.c.b16 %v1398, %v1398
    %v1463 = vpack.c.b16 %v1399, %v1399
    %v1464 = vpack.c.b16 %v1400, %v1400
    %v1465 = vpack.c.b16 %v1401, %v1401
    %v1466 = vpack.c.b16 %v1402, %v1402
    %v1467 = vpack.c.b16 %v1403, %v1403
    %v1468 = vpack.c.b16 %v1404, %v1404
    %v1469 = vpack.c.b16 %v1405, %v1405
    %1534 = vst [vmem:[%s3] sm:$0xf] %v1406
    %1535 = vst [vmem:[%s3 + $0x4] sm:$0xf] %v1407
    %1536 = vst [vmem:[%s3 + $0x8] sm:$0xf] %v1408
    %1537 = vst [vmem:[%s3 + $0xc] sm:$0xf] %v1409
    %1538 = vst [vmem:[%s3 + $0x10] sm:$0xf] %v1410
    %1539 = vst [vmem:[%s3 + $0x14] sm:$0xf] %v1411
    %1540 = vst [vmem:[%s3 + $0x18] sm:$0xf] %v1412
    %1541 = vst [vmem:[%s3 + $0x1c] sm:$0xf] %v1413
    %1542 = vst [vmem:[%s3 + $0x20] sm:$0xf] %v1414
    %1543 = vst [vmem:[%s3 + $0x24] sm:$0xf] %v1415
    %1544 = vst [vmem:[%s3 + $0x28] sm:$0xf] %v1416
    %1545 = vst [vmem:[%s3 + $0x2c] sm:$0xf] %v1417
    %1546 = vst [vmem:[%s3 + $0x30] sm:$0xf] %v1418
    %1547 = vst [vmem:[%s3 + $0x34] sm:$0xf] %v1419
    %1548 = vst [vmem:[%s3 + $0x38] sm:$0xf] %v1420
    %1549 = vst [vmem:[%s3 + $0x3c] sm:$0xf] %v1421
    %1550 = vst [vmem:[%s3 + $0x40] sm:$0xf] %v1422
    %1551 = vst [vmem:[%s3 + $0x44] sm:$0xf] %v1423
    %1552 = vst [vmem:[%s3 + $0x48] sm:$0xf] %v1424
    %1553 = vst [vmem:[%s3 + $0x4c] sm:$0xf] %v1425
    %1554 = vst [vmem:[%s3 + $0x50] sm:$0xf] %v1426
    %1555 = vst [vmem:[%s3 + $0x54] sm:$0xf] %v1427
    %1556 = vst [vmem:[%s3 + $0x58] sm:$0xf] %v1428
    %1557 = vst [vmem:[%s3 + $0x5c] sm:$0xf] %v1429
    %1558 = vst [vmem:[%s3 + $0x60] sm:$0xf] %v1430
    %1559 = vst [vmem:[%s3 + $0x64] sm:$0xf] %v1431
    %1560 = vst [vmem:[%s3 + $0x68] sm:$0xf] %v1432
    %1561 = vst [vmem:[%s3 + $0x6c] sm:$0xf] %v1433
    %1562 = vst [vmem:[%s3 + $0x70] sm:$0xf] %v1434
    %1563 = vst [vmem:[%s3 + $0x74] sm:$0xf] %v1435
    %1564 = vst [vmem:[%s3 + $0x78] sm:$0xf] %v1436
    %1565 = vst [vmem:[%s3 + $0x7c] sm:$0xf] %v1437
    %1566 = vst [vmem:[%s3 + $0x80] sm:$0xf] %v1438
    %1567 = vst [vmem:[%s3 + $0x84] sm:$0xf] %v1439
    %1568 = vst [vmem:[%s3 + $0x88] sm:$0xf] %v1440
    %1569 = vst [vmem:[%s3 + $0x8c] sm:$0xf] %v1441
    %1570 = vst [vmem:[%s3 + $0x90] sm:$0xf] %v1442
    %1571 = vst [vmem:[%s3 + $0x94] sm:$0xf] %v1443
    %1572 = vst [vmem:[%s3 + $0x98] sm:$0xf] %v1444
    %1573 = vst [vmem:[%s3 + $0x9c] sm:$0xf] %v1445
    %1574 = vst [vmem:[%s3 + $0xa0] sm:$0xf] %v1446
    %1575 = vst [vmem:[%s3 + $0xa4] sm:$0xf] %v1447
    %1576 = vst [vmem:[%s3 + $0xa8] sm:$0xf] %v1448
    %1577 = vst [vmem:[%s3 + $0xac] sm:$0xf] %v1449
    %1578 = vst [vmem:[%s3 + $0xb0] sm:$0xf] %v1450
    %1579 = vst [vmem:[%s3 + $0xb4] sm:$0xf] %v1451
    %1580 = vst [vmem:[%s3 + $0xb8] sm:$0xf] %v1452
    %1581 = vst [vmem:[%s3 + $0xbc] sm:$0xf] %v1453
    %1582 = vst [vmem:[%s3 + $0xc0] sm:$0xf] %v1454
    %1583 = vst [vmem:[%s3 + $0xc4] sm:$0xf] %v1455
    %1584 = vst [vmem:[%s3 + $0xc8] sm:$0xf] %v1456
    %1585 = vst [vmem:[%s3 + $0xcc] sm:$0xf] %v1457
    %1586 = vst [vmem:[%s3 + $0xd0] sm:$0xf] %v1458
    %1587 = vst [vmem:[%s3 + $0xd4] sm:$0xf] %v1459
    %1588 = vst [vmem:[%s3 + $0xd8] sm:$0xf] %v1460
    %1589 = vst [vmem:[%s3 + $0xdc] sm:$0xf] %v1461
    %1590 = vst [vmem:[%s3 + $0xe0] sm:$0xf] %v1462
    %1591 = vst [vmem:[%s3 + $0xe4] sm:$0xf] %v1463
    %1592 = vst [vmem:[%s3 + $0xe8] sm:$0xf] %v1464
    %1593 = vst [vmem:[%s3 + $0xec] sm:$0xf] %v1465
    %1594 = vst [vmem:[%s3 + $0xf0] sm:$0xf] %v1466
    %1595 = vst [vmem:[%s3 + $0xf4] sm:$0xf] %v1467
    %1596 = vst [vmem:[%s3 + $0xf8] sm:$0xf] %v1468
    %1597 = vst [vmem:[%s3 + $0xfc] sm:$0xf] %v1469
  $region21: #{matmul_bias_act.1} parent=0 // pred_fallthru
    _
  // Predicated region
  $region22: #{matmul_bias_act.1} parent=0 // pred_check
    _
  $region23: #{matmul_bias_act.1} parent=0 // pred_check_branch
    %1599 = sbr.rel (0) target = $region25
  $region24: #{matmul_bias_act.1} parent=0 // pred_region
    _
  $region25: #{matmul_bias_act.1} parent=0 // pred_fallthru
    _
  // Predicated region
  $region26: #{matmul_bias_act.1} parent=0 // pred_check
    _
  $region27: #{matmul_bias_act.1} parent=0 // pred_check_branch
    %1601 = sbr.rel (0) target = $region29
  $region28: #{matmul_bias_act.1} parent=0 // pred_region
    _
  $region29: #{matmul_bias_act.1} parent=0 // pred_fallthru
    _

</llo_original>
